<compile_context>
chip_gen: v7x
topology: tpu7x:2x2x1
jax: 0.10.0
libtpu: 0.0.40
codegen_flags: <defaults>
</compile_context>

<pallas_src>
import functools

import jax
import jax.numpy as jnp
from jax import lax
from jax.experimental import pallas as pl
from jax.experimental.pallas import tpu as pltpu


def _two_tensorcores_per_device() -> bool:
    """Best-effort: does one device expose 2 TensorCores to a parallel grid?"""
    try:
        kind = jax.devices()[0].device_kind.lower()
    except Exception:
        return False
    return any(tag in kind for tag in ("v4", "v5p", "v7", "7x"))


def _row_col(q, H, W):
    """(row, col) inside the H*W image for a flat output-position iota q."""
    if (W & (W - 1)) == 0 and (H & (H - 1)) == 0:
        # Power-of-two spatial dims: pure bitwise ops (always lowerable).
        col = q & (W - 1)
        row = (q >> (W.bit_length() - 1)) & (H - 1)
    else:
        col = q % W
        row = (q // W) % H
    return row, col


def _conv3x3_kernel(H, W, x_ref, w_ref, b_ref, o_ref):
    """3x3 / stride-1 / pad-1 conv of Bt images as 9 accumulated MXU dots.

    H, W   : spatial dims (Python ints captured by closure).
    x_ref  : (Bt, Cin, H*W)   f32   unpadded images, flat over (H, W).
    w_ref  : (9, Cout, Cin)   bf16  per-tap weight matrices, tap t = dh*3 + dw.
    b_ref  : (Cout, 1)        f32   bias.
    o_ref  : (Bt, Cout, H*W)  f32   dense channel-major output (no garbage cols).
    """
    Bt, Cin, L0 = x_ref.shape
    N = Bt * L0

    # Fold the batch into the matmul N: lane-concat the Bt images.  L0 = H*W
    # (256 here) is a multiple of 128, so the concat and the per-image output
    # slices below are vreg-aligned.  Cast to bf16 once, before the shifts.
    if Bt == 1:
        x = x_ref[0].astype(jnp.bfloat16)                       # (Cin, L0)
    else:
        x = jnp.concatenate(
            [x_ref[i].astype(jnp.bfloat16) for i in range(Bt)], axis=-1)

    # Edge-validity masks replace input zero-padding: a tap whose source pixel
    # falls outside its own image (including bleed across image boundaries of
    # the lane-concat and the circular wrap of the roll) contributes zero.
    q = lax.broadcasted_iota(jnp.int32, (1, N), 1)
    row, col = _row_col(q, H, W)
    not_top, not_bot = row != 0, row != (H - 1)
    not_left, not_right = col != 0, col != (W - 1)

    acc = None
    for dh in range(3):
        for dw in range(3):
            s = (dh - 1) * W + (dw - 1)   # flat lane offset of this tap's source
            # slab[q] = x_flat[q + s] (circular; wrapped lanes are masked below).
            # jnp.roll = 2 static lane slices + concat (guaranteed semantics);
            # pltpu.roll is the single-op XLU rotate — swap in after a bundle check.
            slab = x if s == 0 else jnp.roll(x, -s, axis=-1)
            valid = None
            if dh == 0:
                valid = not_top
            elif dh == 2:
                valid = not_bot
            if dw == 0:
                valid = not_left if valid is None else valid & not_left
            elif dw == 2:
                valid = not_right if valid is None else valid & not_right
            if valid is not None:
                slab = jnp.where(valid, slab, 0)
            # One tiny MXU push per tap (K = Cin = 3); this replaces the
            # misaligned 27-row sublane concat of the im2col variant.
            part = jnp.dot(w_ref[dh * 3 + dw], slab,
                           preferred_element_type=jnp.float32)   # (Cout, N) f32
            acc = part if acc is None else acc + part

    out = acc + b_ref[...]                      # bias broadcast over lanes
    for i in range(Bt):                         # 256-aligned lane slices
        o_ref[i] = out[:, i * L0:(i + 1) * L0].astype(o_ref.dtype)


def conv2d_3x3_same(x_nchw, weight_oihw, bias):
    """PyTorch-equivalent nn.Conv2d(Cin, Cout, 3, stride=1, padding=1)."""
    B, Cin, H, W = x_nchw.shape
    Cout = weight_oihw.shape[0]
    L0 = H * W

    # One grid step per TensorCore: 2 parallel steps on 2-TC chips (v4/v5p/v7x)
    # when the batch splits evenly, otherwise a single step with the whole
    # batch folded into N (v5e/v6e have 1 TC, so 1 step minimizes the fixed
    # ~0.35 us/step overhead that dominates at these toy shapes).
    steps = 2 if (_two_tensorcores_per_device() and B >= 2 and B % 2 == 0) else 1
    bt = B // steps

    # Free reshape (merges contiguous minor dims): NCHW -> (B, Cin, H*W).
    # No jnp.pad and no post-kernel slice: boundary handling happens in-kernel.
    x_flat = x_nchw.reshape(B, Cin, L0)
    # Weights: (Cout, Cin, 3, 3) -> (3, 3, Cout, Cin) -> (9, Cout, Cin) bf16,
    # so tap t = dh*3 + dw is a plain leading-dim index inside the kernel.
    w_taps = (jnp.transpose(weight_oihw, (2, 3, 0, 1))
              .reshape(9, Cout, Cin).astype(jnp.bfloat16))
    b_col = bias.reshape(Cout, 1).astype(jnp.float32)

    kernel = functools.partial(_conv3x3_kernel, H, W)
    out_flat = pl.pallas_call(
        kernel,
        out_shape=jax.ShapeDtypeStruct((B, Cout, L0), x_nchw.dtype),
        grid=(steps,),
        in_specs=[
            pl.BlockSpec((bt, Cin, L0), lambda s: (s, 0, 0)),
            pl.BlockSpec((9, Cout, Cin), lambda s: (0, 0, 0)),   # resident weights
            pl.BlockSpec((Cout, 1), lambda s: (0, 0)),           # resident bias
        ],
        out_specs=pl.BlockSpec((bt, Cout, L0), lambda s: (s, 0, 0)),
        compiler_params=pltpu.CompilerParams(
            dimension_semantics=("parallel",)),   # v4/v5p/v7x: one step per TC
    )(x_flat, w_taps, b_col)

    # Free reshape back to NCHW — the kernel output is already dense, so there
    # is no trailing slice and no transpose.
    return out_flat.reshape(B, Cout, H, W)


def dummy_deeplabv3_forward(params, x_nchw):
    """Forward pass of DummyDeepLabV3: returns {'out': conv(x)}."""
    return {"out": conv2d_3x3_same(x_nchw, params["weight"], params["bias"])}


if __name__ == "__main__":
    B, Cin, H, W, Cout = 2, 3, 16, 16, 21   # module defaults: 3 -> 21 channels

    key = jax.random.PRNGKey(0)
    kx, kw, kb = jax.random.split(key, 3)

    # Deterministic synthetic parameters (nn.Conv2d(3, 21, 3) shapes).
    x = jax.random.normal(kx, (B, Cin, H, W), dtype=jnp.float32)
    weight = jax.random.normal(kw, (Cout, Cin, 3, 3), dtype=jnp.float32) * 0.1
    bias = jax.random.normal(kb, (Cout,), dtype=jnp.float32) * 0.1
    params = {"weight": weight, "bias": bias}

    fwd = jax.jit(dummy_deeplabv3_forward)
    out = fwd(params, x)
    jax.block_until_ready(out["out"])
    assert out["out"].shape == (B, Cout, H, W), out["out"].shape

    # Tight check vs a reference that uses the same bf16 MXU operands / f32 acc.
    ref_bf16 = lax.conv_general_dilated(
        x.astype(jnp.bfloat16), weight.astype(jnp.bfloat16),
        window_strides=(1, 1), padding="SAME",
        dimension_numbers=("NCHW", "OIHW", "NCHW"),
        preferred_element_type=jnp.float32,
    ) + bias[None, :, None, None]
    assert jnp.allclose(out["out"], ref_bf16, atol=5e-3, rtol=5e-3)

    # Loose sanity check vs full-f32 PyTorch semantics (bf16 operand rounding).
    ref_f32 = lax.conv_general_dilated(
        x, weight, window_strides=(1, 1), padding="SAME",
        dimension_numbers=("NCHW", "OIHW", "NCHW"),
    ) + bias[None, :, None, None]
    assert jnp.allclose(out["out"], ref_f32, atol=1e-1, rtol=5e-2)

    print("KERNEL_OK")
</pallas_src>

<mosaic_0001>
module attributes {stable_mosaic.version = 11 : i64} {
  func.func @_conv3x3_kernel(%arg0: i32, %arg1: memref<2x3x256xf32, #tpu.memory_space<vmem>>, %arg2: memref<9x21x3xbf16, #tpu.memory_space<vmem>>, %arg3: memref<21x1xf32, #tpu.memory_space<vmem>>, %arg4: memref<2x21x256xf32, #tpu.memory_space<vmem>>) attributes {dimension_semantics = [#tpu.dimension_semantics<parallel>], iteration_bounds = array<i64: 1>, scalar_prefetch = 0 : i64, scratch_operands = 0 : i64, tpu.core_type = #tpu.core_type<tc>, window_params = [{transform_indices = @transform_0, window_bounds = array<i64: 2, 3, 256>}, {pipeline_mode = #tpu.pipeline_mode<synchronous>, transform_indices = @transform_1, window_bounds = array<i64: 9, 21, 3>}, {pipeline_mode = #tpu.pipeline_mode<synchronous>, transform_indices = @transform_2, window_bounds = array<i64: 21, 1>}, {transform_indices = @transform_3, window_bounds = array<i64: 2, 21, 256>}]} {
    %c0 = arith.constant 0 : index
    %c0_0 = arith.constant 0 : index
    %c0_1 = arith.constant 0 : index
    %0 = vector.load %arg1[%c0, %c0_0, %c0_1] : memref<2x3x256xf32, #tpu.memory_space<vmem>>, vector<1x3x256xf32>
    %1 = vector.shape_cast %0 : vector<1x3x256xf32> to vector<3x256xf32>
    %2 = arith.truncf %1 : vector<3x256xf32> to vector<3x256xbf16>
    %c1 = arith.constant 1 : index
    %c0_2 = arith.constant 0 : index
    %c0_3 = arith.constant 0 : index
    %3 = vector.load %arg1[%c1, %c0_2, %c0_3] : memref<2x3x256xf32, #tpu.memory_space<vmem>>, vector<1x3x256xf32>
    %4 = vector.shape_cast %3 : vector<1x3x256xf32> to vector<3x256xf32>
    %5 = arith.truncf %4 : vector<3x256xf32> to vector<3x256xbf16>
    %6 = tpu.concatenate %2, %5 in 1 : vector<3x256xbf16>, vector<3x256xbf16> -> vector<3x512xbf16>
    %7 = tpu.iota {dimensions = array<i32: 1>} : vector<1x512xi32>
    %c15_i32 = arith.constant 15 : i32
    %8 = vector.broadcast %c15_i32 : i32 to vector<1x512xi32>
    %9 = arith.andi %7, %8 : vector<1x512xi32>
    %c4_i32 = arith.constant 4 : i32
    %10 = vector.broadcast %c4_i32 : i32 to vector<1x512xi32>
    %11 = arith.shrsi %7, %10 : vector<1x512xi32>
    %c15_i32_4 = arith.constant 15 : i32
    %12 = vector.broadcast %c15_i32_4 : i32 to vector<1x512xi32>
    %13 = arith.andi %11, %12 : vector<1x512xi32>
    %c0_i32 = arith.constant 0 : i32
    %14 = vector.broadcast %c0_i32 : i32 to vector<1x512xi32>
    %15 = arith.cmpi ne, %13, %14 : vector<1x512xi32>
    %c15_i32_5 = arith.constant 15 : i32
    %16 = vector.broadcast %c15_i32_5 : i32 to vector<1x512xi32>
    %17 = arith.cmpi ne, %13, %16 : vector<1x512xi32>
    %c0_i32_6 = arith.constant 0 : i32
    %18 = vector.broadcast %c0_i32_6 : i32 to vector<1x512xi32>
    %19 = arith.cmpi ne, %9, %18 : vector<1x512xi32>
    %c15_i32_7 = arith.constant 15 : i32
    %20 = vector.broadcast %c15_i32_7 : i32 to vector<1x512xi32>
    %21 = arith.cmpi ne, %9, %20 : vector<1x512xi32>
    %22 = vector.extract_strided_slice %6 {offsets = [0, 495], sizes = [3, 17], strides = [1, 1]} : vector<3x512xbf16> to vector<3x17xbf16>
    %23 = vector.extract_strided_slice %6 {offsets = [0, 0], sizes = [3, 495], strides = [1, 1]} : vector<3x512xbf16> to vector<3x495xbf16>
    %24 = tpu.concatenate %22, %23 in 1 : vector<3x17xbf16>, vector<3x495xbf16> -> vector<3x512xbf16>
    %25 = arith.andi %15, %19 : vector<1x512xi1>
    %c0_i32_8 = arith.constant 0 : i32
    %26 = arith.sitofp %c0_i32_8 : i32 to bf16
    %27 = vector.shape_cast %25 : vector<1x512xi1> to vector<1x512xi1>
    %28 = vector.broadcast %27 : vector<1x512xi1> to vector<3x512xi1>
    %29 = vector.broadcast %26 : bf16 to vector<3x512xbf16>
    %30 = arith.select %28, %24, %29 : vector<3x512xi1>, vector<3x512xbf16>
    %c0_9 = arith.constant 0 : index
    %c0_10 = arith.constant 0 : index
    %c0_11 = arith.constant 0 : index
    %31 = vector.load %arg2[%c0_9, %c0_10, %c0_11] : memref<9x21x3xbf16, #tpu.memory_space<vmem>>, vector<1x21x3xbf16>
    %32 = vector.shape_cast %31 : vector<1x21x3xbf16> to vector<21x3xbf16>
    %cst = arith.constant dense<0.000000e+00> : vector<21x512xf32>
    %33 = tpu.matmul %32, %30, %cst {dimension_numbers = #tpu.dot_dimension_numbers<[1], [0], [0], [1], [0, 0, 1, 1], [], []>} : vector<21x3xbf16>, vector<3x512xbf16>, vector<21x512xf32> -> vector<21x512xf32>
    %34 = vector.extract_strided_slice %6 {offsets = [0, 496], sizes = [3, 16], strides = [1, 1]} : vector<3x512xbf16> to vector<3x16xbf16>
    %35 = vector.extract_strided_slice %6 {offsets = [0, 0], sizes = [3, 496], strides = [1, 1]} : vector<3x512xbf16> to vector<3x496xbf16>
    %36 = tpu.concatenate %34, %35 in 1 : vector<3x16xbf16>, vector<3x496xbf16> -> vector<3x512xbf16>
    %c0_i32_12 = arith.constant 0 : i32
    %37 = arith.sitofp %c0_i32_12 : i32 to bf16
    %38 = vector.shape_cast %15 : vector<1x512xi1> to vector<1x512xi1>
    %39 = vector.broadcast %38 : vector<1x512xi1> to vector<3x512xi1>
    %40 = vector.broadcast %37 : bf16 to vector<3x512xbf16>
    %41 = arith.select %39, %36, %40 : vector<3x512xi1>, vector<3x512xbf16>
    %c1_13 = arith.constant 1 : index
    %c0_14 = arith.constant 0 : index
    %c0_15 = arith.constant 0 : index
    %42 = vector.load %arg2[%c1_13, %c0_14, %c0_15] : memref<9x21x3xbf16, #tpu.memory_space<vmem>>, vector<1x21x3xbf16>
    %43 = vector.shape_cast %42 : vector<1x21x3xbf16> to vector<21x3xbf16>
    %cst_16 = arith.constant dense<0.000000e+00> : vector<21x512xf32>
    %44 = tpu.matmul %43, %41, %cst_16 {dimension_numbers = #tpu.dot_dimension_numbers<[1], [0], [0], [1], [0, 0, 1, 1], [], []>} : vector<21x3xbf16>, vector<3x512xbf16>, vector<21x512xf32> -> vector<21x512xf32>
    %45 = arith.addf %33, %44 : vector<21x512xf32>
    %46 = vector.extract_strided_slice %6 {offsets = [0, 497], sizes = [3, 15], strides = [1, 1]} : vector<3x512xbf16> to vector<3x15xbf16>
    %47 = vector.extract_strided_slice %6 {offsets = [0, 0], sizes = [3, 497], strides = [1, 1]} : vector<3x512xbf16> to vector<3x497xbf16>
    %48 = tpu.concatenate %46, %47 in 1 : vector<3x15xbf16>, vector<3x497xbf16> -> vector<3x512xbf16>
    %49 = arith.andi %15, %21 : vector<1x512xi1>
    %c0_i32_17 = arith.constant 0 : i32
    %50 = arith.sitofp %c0_i32_17 : i32 to bf16
    %51 = vector.shape_cast %49 : vector<1x512xi1> to vector<1x512xi1>
    %52 = vector.broadcast %51 : vector<1x512xi1> to vector<3x512xi1>
    %53 = vector.broadcast %50 : bf16 to vector<3x512xbf16>
    %54 = arith.select %52, %48, %53 : vector<3x512xi1>, vector<3x512xbf16>
    %c2 = arith.constant 2 : index
    %c0_18 = arith.constant 0 : index
    %c0_19 = arith.constant 0 : index
    %55 = vector.load %arg2[%c2, %c0_18, %c0_19] : memref<9x21x3xbf16, #tpu.memory_space<vmem>>, vector<1x21x3xbf16>
    %56 = vector.shape_cast %55 : vector<1x21x3xbf16> to vector<21x3xbf16>
    %cst_20 = arith.constant dense<0.000000e+00> : vector<21x512xf32>
    %57 = tpu.matmul %56, %54, %cst_20 {dimension_numbers = #tpu.dot_dimension_numbers<[1], [0], [0], [1], [0, 0, 1, 1], [], []>} : vector<21x3xbf16>, vector<3x512xbf16>, vector<21x512xf32> -> vector<21x512xf32>
    %58 = arith.addf %45, %57 : vector<21x512xf32>
    %59 = vector.extract_strided_slice %6 {offsets = [0, 511], sizes = [3, 1], strides = [1, 1]} : vector<3x512xbf16> to vector<3x1xbf16>
    %60 = vector.extract_strided_slice %6 {offsets = [0, 0], sizes = [3, 511], strides = [1, 1]} : vector<3x512xbf16> to vector<3x511xbf16>
    %61 = tpu.concatenate %59, %60 in 1 : vector<3x1xbf16>, vector<3x511xbf16> -> vector<3x512xbf16>
    %c0_i32_21 = arith.constant 0 : i32
    %62 = arith.sitofp %c0_i32_21 : i32 to bf16
    %63 = vector.shape_cast %19 : vector<1x512xi1> to vector<1x512xi1>
    %64 = vector.broadcast %63 : vector<1x512xi1> to vector<3x512xi1>
    %65 = vector.broadcast %62 : bf16 to vector<3x512xbf16>
    %66 = arith.select %64, %61, %65 : vector<3x512xi1>, vector<3x512xbf16>
    %c3 = arith.constant 3 : index
    %c0_22 = arith.constant 0 : index
    %c0_23 = arith.constant 0 : index
    %67 = vector.load %arg2[%c3, %c0_22, %c0_23] : memref<9x21x3xbf16, #tpu.memory_space<vmem>>, vector<1x21x3xbf16>
    %68 = vector.shape_cast %67 : vector<1x21x3xbf16> to vector<21x3xbf16>
    %cst_24 = arith.constant dense<0.000000e+00> : vector<21x512xf32>
    %69 = tpu.matmul %68, %66, %cst_24 {dimension_numbers = #tpu.dot_dimension_numbers<[1], [0], [0], [1], [0, 0, 1, 1], [], []>} : vector<21x3xbf16>, vector<3x512xbf16>, vector<21x512xf32> -> vector<21x512xf32>
    %70 = arith.addf %58, %69 : vector<21x512xf32>
    %c4 = arith.constant 4 : index
    %c0_25 = arith.constant 0 : index
    %c0_26 = arith.constant 0 : index
    %71 = vector.load %arg2[%c4, %c0_25, %c0_26] : memref<9x21x3xbf16, #tpu.memory_space<vmem>>, vector<1x21x3xbf16>
    %72 = vector.shape_cast %71 : vector<1x21x3xbf16> to vector<21x3xbf16>
    %cst_27 = arith.constant dense<0.000000e+00> : vector<21x512xf32>
    %73 = tpu.matmul %72, %6, %cst_27 {dimension_numbers = #tpu.dot_dimension_numbers<[1], [0], [0], [1], [0, 0, 1, 1], [], []>} : vector<21x3xbf16>, vector<3x512xbf16>, vector<21x512xf32> -> vector<21x512xf32>
    %74 = arith.addf %70, %73 : vector<21x512xf32>
    %75 = vector.extract_strided_slice %6 {offsets = [0, 1], sizes = [3, 511], strides = [1, 1]} : vector<3x512xbf16> to vector<3x511xbf16>
    %76 = vector.extract_strided_slice %6 {offsets = [0, 0], sizes = [3, 1], strides = [1, 1]} : vector<3x512xbf16> to vector<3x1xbf16>
    %77 = tpu.concatenate %75, %76 in 1 : vector<3x511xbf16>, vector<3x1xbf16> -> vector<3x512xbf16>
    %c0_i32_28 = arith.constant 0 : i32
    %78 = arith.sitofp %c0_i32_28 : i32 to bf16
    %79 = vector.shape_cast %21 : vector<1x512xi1> to vector<1x512xi1>
    %80 = vector.broadcast %79 : vector<1x512xi1> to vector<3x512xi1>
    %81 = vector.broadcast %78 : bf16 to vector<3x512xbf16>
    %82 = arith.select %80, %77, %81 : vector<3x512xi1>, vector<3x512xbf16>
    %c5 = arith.constant 5 : index
    %c0_29 = arith.constant 0 : index
    %c0_30 = arith.constant 0 : index
    %83 = vector.load %arg2[%c5, %c0_29, %c0_30] : memref<9x21x3xbf16, #tpu.memory_space<vmem>>, vector<1x21x3xbf16>
    %84 = vector.shape_cast %83 : vector<1x21x3xbf16> to vector<21x3xbf16>
    %cst_31 = arith.constant dense<0.000000e+00> : vector<21x512xf32>
    %85 = tpu.matmul %84, %82, %cst_31 {dimension_numbers = #tpu.dot_dimension_numbers<[1], [0], [0], [1], [0, 0, 1, 1], [], []>} : vector<21x3xbf16>, vector<3x512xbf16>, vector<21x512xf32> -> vector<21x512xf32>
    %86 = arith.addf %74, %85 : vector<21x512xf32>
    %87 = vector.extract_strided_slice %6 {offsets = [0, 15], sizes = [3, 497], strides = [1, 1]} : vector<3x512xbf16> to vector<3x497xbf16>
    %88 = vector.extract_strided_slice %6 {offsets = [0, 0], sizes = [3, 15], strides = [1, 1]} : vector<3x512xbf16> to vector<3x15xbf16>
    %89 = tpu.concatenate %87, %88 in 1 : vector<3x497xbf16>, vector<3x15xbf16> -> vector<3x512xbf16>
    %90 = arith.andi %17, %19 : vector<1x512xi1>
    %c0_i32_32 = arith.constant 0 : i32
    %91 = arith.sitofp %c0_i32_32 : i32 to bf16
    %92 = vector.shape_cast %90 : vector<1x512xi1> to vector<1x512xi1>
    %93 = vector.broadcast %92 : vector<1x512xi1> to vector<3x512xi1>
    %94 = vector.broadcast %91 : bf16 to vector<3x512xbf16>
    %95 = arith.select %93, %89, %94 : vector<3x512xi1>, vector<3x512xbf16>
    %c6 = arith.constant 6 : index
    %c0_33 = arith.constant 0 : index
    %c0_34 = arith.constant 0 : index
    %96 = vector.load %arg2[%c6, %c0_33, %c0_34] : memref<9x21x3xbf16, #tpu.memory_space<vmem>>, vector<1x21x3xbf16>
    %97 = vector.shape_cast %96 : vector<1x21x3xbf16> to vector<21x3xbf16>
    %cst_35 = arith.constant dense<0.000000e+00> : vector<21x512xf32>
    %98 = tpu.matmul %97, %95, %cst_35 {dimension_numbers = #tpu.dot_dimension_numbers<[1], [0], [0], [1], [0, 0, 1, 1], [], []>} : vector<21x3xbf16>, vector<3x512xbf16>, vector<21x512xf32> -> vector<21x512xf32>
    %99 = arith.addf %86, %98 : vector<21x512xf32>
    %100 = vector.extract_strided_slice %6 {offsets = [0, 16], sizes = [3, 496], strides = [1, 1]} : vector<3x512xbf16> to vector<3x496xbf16>
    %101 = vector.extract_strided_slice %6 {offsets = [0, 0], sizes = [3, 16], strides = [1, 1]} : vector<3x512xbf16> to vector<3x16xbf16>
    %102 = tpu.concatenate %100, %101 in 1 : vector<3x496xbf16>, vector<3x16xbf16> -> vector<3x512xbf16>
    %c0_i32_36 = arith.constant 0 : i32
    %103 = arith.sitofp %c0_i32_36 : i32 to bf16
    %104 = vector.shape_cast %17 : vector<1x512xi1> to vector<1x512xi1>
    %105 = vector.broadcast %104 : vector<1x512xi1> to vector<3x512xi1>
    %106 = vector.broadcast %103 : bf16 to vector<3x512xbf16>
    %107 = arith.select %105, %102, %106 : vector<3x512xi1>, vector<3x512xbf16>
    %c7 = arith.constant 7 : index
    %c0_37 = arith.constant 0 : index
    %c0_38 = arith.constant 0 : index
    %108 = vector.load %arg2[%c7, %c0_37, %c0_38] : memref<9x21x3xbf16, #tpu.memory_space<vmem>>, vector<1x21x3xbf16>
    %109 = vector.shape_cast %108 : vector<1x21x3xbf16> to vector<21x3xbf16>
    %cst_39 = arith.constant dense<0.000000e+00> : vector<21x512xf32>
    %110 = tpu.matmul %109, %107, %cst_39 {dimension_numbers = #tpu.dot_dimension_numbers<[1], [0], [0], [1], [0, 0, 1, 1], [], []>} : vector<21x3xbf16>, vector<3x512xbf16>, vector<21x512xf32> -> vector<21x512xf32>
    %111 = arith.addf %99, %110 : vector<21x512xf32>
    %112 = vector.extract_strided_slice %6 {offsets = [0, 17], sizes = [3, 495], strides = [1, 1]} : vector<3x512xbf16> to vector<3x495xbf16>
    %113 = vector.extract_strided_slice %6 {offsets = [0, 0], sizes = [3, 17], strides = [1, 1]} : vector<3x512xbf16> to vector<3x17xbf16>
    %114 = tpu.concatenate %112, %113 in 1 : vector<3x495xbf16>, vector<3x17xbf16> -> vector<3x512xbf16>
    %115 = arith.andi %17, %21 : vector<1x512xi1>
    %c0_i32_40 = arith.constant 0 : i32
    %116 = arith.sitofp %c0_i32_40 : i32 to bf16
    %117 = vector.shape_cast %115 : vector<1x512xi1> to vector<1x512xi1>
    %118 = vector.broadcast %117 : vector<1x512xi1> to vector<3x512xi1>
    %119 = vector.broadcast %116 : bf16 to vector<3x512xbf16>
    %120 = arith.select %118, %114, %119 : vector<3x512xi1>, vector<3x512xbf16>
    %c8 = arith.constant 8 : index
    %c0_41 = arith.constant 0 : index
    %c0_42 = arith.constant 0 : index
    %121 = vector.load %arg2[%c8, %c0_41, %c0_42] : memref<9x21x3xbf16, #tpu.memory_space<vmem>>, vector<1x21x3xbf16>
    %122 = vector.shape_cast %121 : vector<1x21x3xbf16> to vector<21x3xbf16>
    %cst_43 = arith.constant dense<0.000000e+00> : vector<21x512xf32>
    %123 = tpu.matmul %122, %120, %cst_43 {dimension_numbers = #tpu.dot_dimension_numbers<[1], [0], [0], [1], [0, 0, 1, 1], [], []>} : vector<21x3xbf16>, vector<3x512xbf16>, vector<21x512xf32> -> vector<21x512xf32>
    %124 = arith.addf %111, %123 : vector<21x512xf32>
    %c0_44 = arith.constant 0 : index
    %c0_45 = arith.constant 0 : index
    %125 = vector.load %arg3[%c0_44, %c0_45] : memref<21x1xf32, #tpu.memory_space<vmem>>, vector<21x1xf32>
    %126 = vector.broadcast %125 : vector<21x1xf32> to vector<21x512xf32>
    %127 = arith.addf %124, %126 : vector<21x512xf32>
    %128 = vector.extract_strided_slice %127 {offsets = [0, 0], sizes = [21, 256], strides = [1, 1]} : vector<21x512xf32> to vector<21x256xf32>
    %c0_46 = arith.constant 0 : index
    %c0_47 = arith.constant 0 : index
    %c0_48 = arith.constant 0 : index
    %129 = vector.load %arg4[%c0_46, %c0_47, %c0_48] : memref<2x21x256xf32, #tpu.memory_space<vmem>>, vector<1x21x256xf32>
    %130 = vector.shape_cast %129 : vector<1x21x256xf32> to vector<21x256xf32>
    %131 = vector.shape_cast %128 : vector<21x256xf32> to vector<1x21x256xf32>
    tpu.vector_store %arg4[%c0_46, %c0_47, %c0_48], %131 {strides = array<i32>} : memref<2x21x256xf32, #tpu.memory_space<vmem>>, vector<1x21x256xf32>,
    %132 = vector.extract_strided_slice %127 {offsets = [0, 256], sizes = [21, 256], strides = [1, 1]} : vector<21x512xf32> to vector<21x256xf32>
    %c1_49 = arith.constant 1 : index
    %c0_50 = arith.constant 0 : index
    %c0_51 = arith.constant 0 : index
    %133 = vector.load %arg4[%c1_49, %c0_50, %c0_51] : memref<2x21x256xf32, #tpu.memory_space<vmem>>, vector<1x21x256xf32>
    %134 = vector.shape_cast %133 : vector<1x21x256xf32> to vector<21x256xf32>
    %135 = vector.shape_cast %132 : vector<21x256xf32> to vector<1x21x256xf32>
    tpu.vector_store %arg4[%c1_49, %c0_50, %c0_51], %135 {strides = array<i32>} : memref<2x21x256xf32, #tpu.memory_space<vmem>>, vector<1x21x256xf32>,
    return
  }
  func.func @transform_0(%arg0: i32) -> (i32, i32, i32) {
    %c0_i32 = arith.constant 0 : i32
    %c0_i32_0 = arith.constant 0 : i32
    %c0_i32_1 = arith.constant 0 : i32
    return %arg0, %c0_i32, %c0_i32_0 : i32, i32, i32
  }
  func.func @transform_1(%arg0: i32) -> (i32, i32, i32) {
    %c0_i32 = arith.constant 0 : i32
    %c0_i32_0 = arith.constant 0 : i32
    %c0_i32_1 = arith.constant 0 : i32
    %c0_i32_2 = arith.constant 0 : i32
    return %c0_i32, %c0_i32_0, %c0_i32_1 : i32, i32, i32
  }
  func.func @transform_2(%arg0: i32) -> (i32, i32) {
    %c0_i32 = arith.constant 0 : i32
    %c0_i32_0 = arith.constant 0 : i32
    %c0_i32_1 = arith.constant 0 : i32
    return %c0_i32, %c0_i32_0 : i32, i32
  }
  func.func @transform_3(%arg0: i32) -> (i32, i32, i32) {
    %c0_i32 = arith.constant 0 : i32
    %c0_i32_0 = arith.constant 0 : i32
    %c0_i32_1 = arith.constant 0 : i32
    return %arg0, %c0_i32, %c0_i32_0 : i32, i32, i32
  }
}

</mosaic_0001>

<llo_original>
// kernel: dummy_deeplabv3_forward.1
$region0: #{dummy_deeplabv3_forward.1}
  #allocation0 [shape = 'u32[]', space=smem, size = 0x4, offset = 0x4, fixed_abs, tag = 'smem constant byte address 0x4 - core index']
  #allocation1 [shape = 'u32[144,128]{1,0:T(1,128)}', space=vmem, size = 0x12000, scoped, tag = 'internal scratch']
  %s0 = inlined_call_operand.vmem [shape: f32[2,3,256], index: 0, kind: input, shape index: {}]
  %s1 = inlined_call_operand.vmem [shape: bf16[9,21,3], index: 1, kind: input, shape index: {}]
  %s2 = inlined_call_operand.vmem [shape: f32[21,1], index: 2, kind: input, shape index: {}]
  %s3 = inlined_call_operand.vmem [shape: f32[2,21,256], index: 3, kind: output, shape index: {}]
  %s4 = sld [smem:[#allocation0]]
  $region22: #{dummy_deeplabv3_forward.1} parent=0
    _
  %s6 = ssub.s32 1, %s4
  %s7 = scalar_select 0, %s6, %s4
  // Predicated region
  $region2: #{dummy_deeplabv3_forward.1} parent=0 // pred_check
    _
  $region3: #{dummy_deeplabv3_forward.1} parent=0 // pred_check_branch
    %9 = sbr.rel (0) target = $region5
  $region4: #{dummy_deeplabv3_forward.1} parent=0 // pred_region
    _
  $region5: #{dummy_deeplabv3_forward.1} parent=0 // pred_fallthru
    _
  // Predicated region
  $region6: #{dummy_deeplabv3_forward.1} parent=0 // pred_check
    _
  $region7: #{dummy_deeplabv3_forward.1} parent=0 // pred_check_branch
    %11 = sbr.rel (0) target = $region9
  $region8: #{dummy_deeplabv3_forward.1} parent=0 // pred_region
    _
  $region9: #{dummy_deeplabv3_forward.1} parent=0 // pred_fallthru
    _
  // Predicated region
  $region10: #{dummy_deeplabv3_forward.1} parent=0 // pred_check
    _
  $region11: #{dummy_deeplabv3_forward.1} parent=0 // pred_check_branch
    %13 = sbr.rel (0) target = $region13
  $region12: #{dummy_deeplabv3_forward.1} parent=0 // pred_region
    _
  $region13: #{dummy_deeplabv3_forward.1} parent=0 // pred_fallthru
    _
  %v17 = vld [vmem:[%s0] sm:$0x77]
  %v19 = vcombine.high %v17, %v17
  %v21 = vpack.c.bf16 %v17, %v17
  %v22 = vpack.c.bf16 %v19, %v19
  %s23 = scalar_lea.vmem %s0, 8
  %v24 = vld [vmem:[%s23] sm:$0x77]
  %v26 = vcombine.high %v24, %v24
  %v28 = vpack.c.bf16 %v24, %v24
  %v29 = vpack.c.bf16 %v26, %v26
  %v30 = vlaneseq
  %v31 = vand.u32 %v30, 127
  %v32 = vadd.s32 %v31, 128
  %v33 = vadd.s32 %v31, 256
  %v34 = vadd.s32 %v31, 384
  %v35 = vand.u32 %v31, 15
  %v36 = vand.u32 %v32, 15
  %v37 = vand.u32 %v33, 15
  %v38 = vand.u32 %v34, 15
  %v39 = vshra.s32 %v31, 4
  %v40 = vshra.s32 %v32, 4
  %v41 = vshra.s32 %v33, 4
  %v42 = vshra.s32 %v34, 4
  %v43 = vand.u32 %v39, 15
  %v44 = vand.u32 %v40, 15
  %v45 = vand.u32 %v41, 15
  %v46 = vand.u32 %v42, 15
  %vm47 = vcmp.ne.s32.totalorder %v43, 0
  %vm48 = vcmp.ne.s32.totalorder %v44, 0
  %vm49 = vcmp.ne.s32.totalorder %v45, 0
  %vm50 = vcmp.ne.s32.totalorder %v46, 0
  %vm51 = vcmp.ne.s32.totalorder %v43, 15
  %vm52 = vcmp.ne.s32.totalorder %v44, 15
  %vm53 = vcmp.ne.s32.totalorder %v45, 15
  %vm54 = vcmp.ne.s32.totalorder %v46, 15
  %vm55 = vcmp.ne.s32.totalorder %v35, 0
  %vm56 = vcmp.ne.s32.totalorder %v36, 0
  %vm57 = vcmp.ne.s32.totalorder %v37, 0
  %vm58 = vcmp.ne.s32.totalorder %v38, 0
  %vm59 = vcmp.ne.s32.totalorder %v35, 15
  %vm60 = vcmp.ne.s32.totalorder %v36, 15
  %vm61 = vcmp.ne.s32.totalorder %v37, 15
  %vm62 = vcmp.ne.s32.totalorder %v38, 15
  %64 = vrot.lane.b32.xlu0 %v29, 17
  %v65 = vpop.permute.xlu0 %64
  %69 = vrot.lane.b32.xlu0 %v21, 17
  %v70 = vpop.permute.xlu0 %69
  %71 = vrot.lane.b32.xlu0 %v22, 17
  %v72 = vpop.permute.xlu0 %71
  %73 = vrot.lane.b32.xlu0 %v28, 17
  %v74 = vpop.permute.xlu0 %73
  %vm75 = vcmask 138240
  %v76 = vsel %vm75, %v70, %v72
  %v77 = vsel %vm75, %v72, %v74
  %v78 = vsel %vm75, %v74, %v65
  %vm82 = vcmask 138240
  %v85 = vsel %vm82, %v65, %v70
  %vm87 = vmand %vm47, %vm55
  %vm88 = vmand %vm48, %vm56
  %vm89 = vmand %vm49, %vm57
  %vm90 = vmand %vm50, %vm58
  %v91 = vsel %vm87, 1, 0
  %v92 = vsel %vm88, 1, 0
  %v93 = vsel %vm89, 1, 0
  %v94 = vsel %vm90, 1, 0
  %vm95 = vcmp.eq.s32.totalorder %v91, 1
  %vm96 = vcmp.eq.s32.totalorder %v92, 1
  %vm97 = vcmp.eq.s32.totalorder %v93, 1
  %vm98 = vcmp.eq.s32.totalorder %v94, 1
  %vm99 = vmpackc.low %vm96, %vm95
  %vm100 = vmpackc.low %vm98, %vm97
  %v101 = vsel %vm99, 65537, 0
  %v102 = vsel %vm100, 65537, 0
  %v103 = vlaneseq
  %v104 = vshrl.u32 %v103, 7
  %v105 = vsub.s32 0, %v104
  %v106 = vrot.slane %v101, %v105
  %v107 = vlaneseq
  %v108 = vshrl.u32 %v107, 7
  %v109 = vsub.s32 4, %v108
  %v110 = vrot.slane %v101, %v109
  %v111 = vlaneseq
  %v112 = vshrl.u32 %v111, 7
  %v113 = vsub.s32 0, %v112
  %v114 = vrot.slane %v102, %v113
  %v115 = vlaneseq
  %v116 = vshrl.u32 %v115, 7
  %v117 = vsub.s32 4, %v116
  %v118 = vrot.slane %v102, %v117
  %vm119 = vcmp.ne.s16.totalorder %v106, 0
  %vm120 = vcmp.ne.s16.totalorder %v110, 0
  %vm121 = vcmp.ne.s16.totalorder %v114, 0
  %vm122 = vcmp.ne.s16.totalorder %v118, 0
  %v123 = vsel %vm119, %v85, 0
  %v124 = vsel %vm120, %v76, 0
  %v125 = vsel %vm121, %v77, 0
  %v126 = vsel %vm122, %v78, 0
  %v127 = vld [vmem:[%s1] sm:$0xf]
  %v128 = vld [vmem:[%s1 + $0x4] sm:$0xf]
  %v129 = vld [vmem:[%s1 + $0x8] sm:$0x7]
  %130 = vrot.lane.b32.xlu0 %v29, 16
  %v131 = vpop.permute.xlu0 %130
  %132 = vrot.lane.b32.xlu0 %v21, 16
  %v133 = vpop.permute.xlu0 %132
  %134 = vrot.lane.b32.xlu0 %v22, 16
  %v135 = vpop.permute.xlu0 %134
  %136 = vrot.lane.b32.xlu0 %v28, 16
  %v137 = vpop.permute.xlu0 %136
  %vm138 = vcmask 130048
  %v139 = vsel %vm138, %v133, %v135
  %v140 = vsel %vm138, %v135, %v137
  %v141 = vsel %vm138, %v137, %v131
  %vm145 = vcmask 130048
  %v148 = vsel %vm145, %v131, %v133
  %v150 = vsel %vm47, 1, 0
  %v151 = vsel %vm48, 1, 0
  %v152 = vsel %vm49, 1, 0
  %v153 = vsel %vm50, 1, 0
  %vm154 = vcmp.eq.s32.totalorder %v150, 1
  %vm155 = vcmp.eq.s32.totalorder %v151, 1
  %vm156 = vcmp.eq.s32.totalorder %v152, 1
  %vm157 = vcmp.eq.s32.totalorder %v153, 1
  %vm158 = vmpackc.low %vm155, %vm154
  %vm159 = vmpackc.low %vm157, %vm156
  %v160 = vsel %vm158, 65537, 0
  %v161 = vsel %vm159, 65537, 0
  %v162 = vlaneseq
  %v163 = vshrl.u32 %v162, 7
  %v164 = vsub.s32 0, %v163
  %v165 = vrot.slane %v160, %v164
  %v166 = vlaneseq
  %v167 = vshrl.u32 %v166, 7
  %v168 = vsub.s32 4, %v167
  %v169 = vrot.slane %v160, %v168
  %v170 = vlaneseq
  %v171 = vshrl.u32 %v170, 7
  %v172 = vsub.s32 0, %v171
  %v173 = vrot.slane %v161, %v172
  %v174 = vlaneseq
  %v175 = vshrl.u32 %v174, 7
  %v176 = vsub.s32 4, %v175
  %v177 = vrot.slane %v161, %v176
  %vm178 = vcmp.ne.s16.totalorder %v165, 0
  %vm179 = vcmp.ne.s16.totalorder %v169, 0
  %vm180 = vcmp.ne.s16.totalorder %v173, 0
  %vm181 = vcmp.ne.s16.totalorder %v177, 0
  %v182 = vsel %vm178, %v148, 0
  %v183 = vsel %vm179, %v139, 0
  %v184 = vsel %vm180, %v140, 0
  %v185 = vsel %vm181, %v141, 0
  %s186 = scalar_lea.vmem %s1, 12
  %v187 = vld [vmem:[%s186] sm:$0xf]
  %v188 = vld [vmem:[%s186 + $0x4] sm:$0xf]
  %v189 = vld [vmem:[%s186 + $0x8] sm:$0x7]
  %v193 = vunpack.c.l.b16 %v187
  %v194 = vunpack.c.l.b16 %v188
  %v195 = vunpack.c.l.b16 %v189
  %v196 = vpack.c.b16 %v194, %v193
  %v197 = vpack.c.b16 %v195, %v195
  %vm198 = vcmask 23552
  %v200 = vsel %vm198, %v196, 0
  %v203 = vsel %vm198, %v197, 0
  %vm205 = vcmask 1040384
  %vm206 = vcmask 1041408
  %v207 = vsel %vm205, 4294967295, 65535
  %v208 = vsel %vm206, %v207, 0
  %v210 = vand.u32 %v182, %v208
  %v213 = vand.u32 %v183, %v208
  %v216 = vand.u32 %v184, %v208
  %v219 = vand.u32 %v185, %v208
  %221 = vmatprep.subr.bf16.mxu0 %v213
  %222 = vmatpush1.bf16.msra.mxu0 %v210
  %223 = vmatprep.subr.bf16.mxu0 0
  %224 = vmatpush1.bf16.msra.mxu0 0
  %225 = vmatprep.subr.bf16.mxu0 0
  %226 = vmatpush1.bf16.msra.mxu0 0
  %227 = vmatprep.subr.bf16.mxu0 0
  %228 = vmatpush1.bf16.msra.mxu0 0
  %229 = vmatprep.subr.bf16.mxu0 0
  %230 = vmatpush1.bf16.msra.mxu0 0
  %231 = vmatprep.subr.bf16.mxu0 0
  %232 = vmatpush1.bf16.msra.mxu0 0
  %233 = vmatprep.subr.bf16.mxu0 0
  %234 = vmatpush1.bf16.msra.mxu0 0
  %235 = vmatprep.subr.bf16.mxu0 0
  %236 = vmatpush1.bf16.msra.mxu0 0
  %237 = vmatprep.subr.bf16.mxu0 0
  %238 = vmatpush1.bf16.msra.mxu0 0
  %239 = vmatprep.subr.bf16.mxu0 0
  %240 = vmatpush1.bf16.msra.mxu0 0
  %241 = vmatprep.subr.bf16.mxu0 0
  %242 = vmatpush1.bf16.msra.mxu0 0
  %243 = vmatprep.subr.bf16.mxu0 0
  %244 = vmatpush1.bf16.msra.mxu0 0
  %245 = vmatprep.subr.bf16.mxu0 0
  %246 = vmatpush1.bf16.msra.mxu0 0
  %247 = vmatprep.subr.bf16.mxu0 0
  %248 = vmatpush1.bf16.msra.mxu0 0
  %249 = vmatprep.subr.bf16.mxu0 0
  %250 = vmatpush1.bf16.msra.mxu0 0
  %251 = vmatprep.subr.bf16.mxu0 0
  %252 = vmatpush1.bf16.msra.mxu0 0
  %253 = vmatprep.mubr.bf16.mxu0 0
  %254 = vmatmul.mubr.bf16.gmra.mrb[0].mxu0 %v200
  %v255 = vpop.f32.mrb[0].mxu0
  %v256 = vadd.f32 0.0, %v255
  %v257 = vpop.f32.mrb[0].mxu0
  %v258 = vadd.f32 0.0, %v257
  %v259 = vpop.f32.mrb[0].mxu0
  %v260 = vadd.f32 0.0, %v259
  %v261 = vpop.f32.mrb[0].mxu0
  %v262 = vadd.f32 0.0, %v261
  %263 = vmatprep.mubr.bf16.mxu0 0
  %264 = vmatmul.mubr.bf16.gmra.mrb[0].mxu0 %v203
  %v265 = vpop.f32.mrb[0].mxu0
  %v266 = vadd.f32 0.0, %v265
  %v267 = vpop.f32.mrb[0].mxu0
  %v268 = vadd.f32 0.0, %v267
  %v269 = vpop.f32.mrb[0].mxu0
  %v270 = vpop.f32.mrb[0].mxu0
  %271 = vdwg.mxu0
  %272 = vmatprep.subr.bf16.mxu0 %v219
  %273 = vmatpush1.bf16.msra.mxu0 %v216
  %274 = vmatprep.subr.bf16.mxu0 0
  %275 = vmatpush1.bf16.msra.mxu0 0
  %276 = vmatprep.subr.bf16.mxu0 0
  %277 = vmatpush1.bf16.msra.mxu0 0
  %278 = vmatprep.subr.bf16.mxu0 0
  %279 = vmatpush1.bf16.msra.mxu0 0
  %280 = vmatprep.subr.bf16.mxu0 0
  %281 = vmatpush1.bf16.msra.mxu0 0
  %282 = vmatprep.subr.bf16.mxu0 0
  %283 = vmatpush1.bf16.msra.mxu0 0
  %284 = vmatprep.subr.bf16.mxu0 0
  %285 = vmatpush1.bf16.msra.mxu0 0
  %286 = vmatprep.subr.bf16.mxu0 0
  %287 = vmatpush1.bf16.msra.mxu0 0
  %288 = vmatprep.subr.bf16.mxu0 0
  %289 = vmatpush1.bf16.msra.mxu0 0
  %290 = vmatprep.subr.bf16.mxu0 0
  %291 = vmatpush1.bf16.msra.mxu0 0
  %292 = vmatprep.subr.bf16.mxu0 0
  %293 = vmatpush1.bf16.msra.mxu0 0
  %294 = vmatprep.subr.bf16.mxu0 0
  %295 = vmatpush1.bf16.msra.mxu0 0
  %296 = vmatprep.subr.bf16.mxu0 0
  %297 = vmatpush1.bf16.msra.mxu0 0
  %298 = vmatprep.subr.bf16.mxu0 0
  %299 = vmatpush1.bf16.msra.mxu0 0
  %300 = vmatprep.subr.bf16.mxu0 0
  %301 = vmatpush1.bf16.msra.mxu0 0
  %302 = vmatprep.subr.bf16.mxu0 0
  %303 = vmatpush1.bf16.msra.mxu0 0
  %304 = vmatprep.mubr.bf16.mxu0 0
  %305 = vmatmul.mubr.bf16.gmra.mrb[0].mxu0 %v200
  %v306 = vpop.f32.mrb[0].mxu0
  %v307 = vadd.f32 0.0, %v306
  %v308 = vpop.f32.mrb[0].mxu0
  %v309 = vadd.f32 0.0, %v308
  %v310 = vpop.f32.mrb[0].mxu0
  %v311 = vadd.f32 0.0, %v310
  %v312 = vpop.f32.mrb[0].mxu0
  %v313 = vadd.f32 0.0, %v312
  %314 = vmatprep.mubr.bf16.mxu0 0
  %315 = vmatmul.mubr.bf16.gmra.mrb[0].mxu0 %v203
  %v316 = vpop.f32.mrb[0].mxu0
  %v317 = vadd.f32 0.0, %v316
  %v318 = vpop.f32.mrb[0].mxu0
  %v319 = vadd.f32 0.0, %v318
  %v320 = vpop.f32.mrb[0].mxu0
  %v321 = vpop.f32.mrb[0].mxu0
  %322 = vdwg.mxu0
  %v326 = vunpack.c.l.b16 %v127
  %v327 = vunpack.c.l.b16 %v128
  %v328 = vunpack.c.l.b16 %v129
  %v329 = vpack.c.b16 %v327, %v326
  %v330 = vpack.c.b16 %v328, %v328
  %v332 = vsel %vm198, %v329, 0
  %v335 = vsel %vm198, %v330, 0
  %v338 = vand.u32 %v123, %v208
  %v341 = vand.u32 %v124, %v208
  %v344 = vand.u32 %v125, %v208
  %v347 = vand.u32 %v126, %v208
  %349 = vmatprep.subr.bf16.mxu0 %v341
  %350 = vmatpush1.bf16.msra.mxu0 %v338
  %351 = vmatprep.subr.bf16.mxu0 0
  %352 = vmatpush1.bf16.msra.mxu0 0
  %353 = vmatprep.subr.bf16.mxu0 0
  %354 = vmatpush1.bf16.msra.mxu0 0
  %355 = vmatprep.subr.bf16.mxu0 0
  %356 = vmatpush1.bf16.msra.mxu0 0
  %357 = vmatprep.subr.bf16.mxu0 0
  %358 = vmatpush1.bf16.msra.mxu0 0
  %359 = vmatprep.subr.bf16.mxu0 0
  %360 = vmatpush1.bf16.msra.mxu0 0
  %361 = vmatprep.subr.bf16.mxu0 0
  %362 = vmatpush1.bf16.msra.mxu0 0
  %363 = vmatprep.subr.bf16.mxu0 0
  %364 = vmatpush1.bf16.msra.mxu0 0
  %365 = vmatprep.subr.bf16.mxu0 0
  %366 = vmatpush1.bf16.msra.mxu0 0
  %367 = vmatprep.subr.bf16.mxu0 0
  %368 = vmatpush1.bf16.msra.mxu0 0
  %369 = vmatprep.subr.bf16.mxu0 0
  %370 = vmatpush1.bf16.msra.mxu0 0
  %371 = vmatprep.subr.bf16.mxu0 0
  %372 = vmatpush1.bf16.msra.mxu0 0
  %373 = vmatprep.subr.bf16.mxu0 0
  %374 = vmatpush1.bf16.msra.mxu0 0
  %375 = vmatprep.subr.bf16.mxu0 0
  %376 = vmatpush1.bf16.msra.mxu0 0
  %377 = vmatprep.subr.bf16.mxu0 0
  %378 = vmatpush1.bf16.msra.mxu0 0
  %379 = vmatprep.subr.bf16.mxu0 0
  %380 = vmatpush1.bf16.msra.mxu0 0
  %381 = vmatprep.mubr.bf16.mxu0 0
  %382 = vmatmul.mubr.bf16.gmra.mrb[0].mxu0 %v332
  %v383 = vpop.f32.mrb[0].mxu0
  %v384 = vadd.f32 %v256, %v383
  %v385 = vpop.f32.mrb[0].mxu0
  %v386 = vadd.f32 %v258, %v385
  %v387 = vpop.f32.mrb[0].mxu0
  %v388 = vadd.f32 %v260, %v387
  %v389 = vpop.f32.mrb[0].mxu0
  %v390 = vadd.f32 %v262, %v389
  %391 = vmatprep.mubr.bf16.mxu0 0
  %392 = vmatmul.mubr.bf16.gmra.mrb[0].mxu0 %v335
  %v393 = vpop.f32.mrb[0].mxu0
  %v394 = vadd.f32 %v266, %v393
  %v395 = vpop.f32.mrb[0].mxu0
  %v396 = vadd.f32 %v268, %v395
  %v397 = vpop.f32.mrb[0].mxu0
  %v398 = vpop.f32.mrb[0].mxu0
  %399 = vdwg.mxu0
  %400 = vmatprep.subr.bf16.mxu0 %v347
  %401 = vmatpush1.bf16.msra.mxu0 %v344
  %402 = vmatprep.subr.bf16.mxu0 0
  %403 = vmatpush1.bf16.msra.mxu0 0
  %404 = vmatprep.subr.bf16.mxu0 0
  %405 = vmatpush1.bf16.msra.mxu0 0
  %406 = vmatprep.subr.bf16.mxu0 0
  %407 = vmatpush1.bf16.msra.mxu0 0
  %408 = vmatprep.subr.bf16.mxu0 0
  %409 = vmatpush1.bf16.msra.mxu0 0
  %410 = vmatprep.subr.bf16.mxu0 0
  %411 = vmatpush1.bf16.msra.mxu0 0
  %412 = vmatprep.subr.bf16.mxu0 0
  %413 = vmatpush1.bf16.msra.mxu0 0
  %414 = vmatprep.subr.bf16.mxu0 0
  %415 = vmatpush1.bf16.msra.mxu0 0
  %416 = vmatprep.subr.bf16.mxu0 0
  %417 = vmatpush1.bf16.msra.mxu0 0
  %418 = vmatprep.subr.bf16.mxu0 0
  %419 = vmatpush1.bf16.msra.mxu0 0
  %420 = vmatprep.subr.bf16.mxu0 0
  %421 = vmatpush1.bf16.msra.mxu0 0
  %422 = vmatprep.subr.bf16.mxu0 0
  %423 = vmatpush1.bf16.msra.mxu0 0
  %424 = vmatprep.subr.bf16.mxu0 0
  %425 = vmatpush1.bf16.msra.mxu0 0
  %426 = vmatprep.subr.bf16.mxu0 0
  %427 = vmatpush1.bf16.msra.mxu0 0
  %428 = vmatprep.subr.bf16.mxu0 0
  %429 = vmatpush1.bf16.msra.mxu0 0
  %430 = vmatprep.subr.bf16.mxu0 0
  %431 = vmatpush1.bf16.msra.mxu0 0
  %432 = vmatprep.mubr.bf16.mxu0 0
  %433 = vmatmul.mubr.bf16.gmra.mrb[0].mxu0 %v332
  %v434 = vpop.f32.mrb[0].mxu0
  %v435 = vadd.f32 %v307, %v434
  %v436 = vpop.f32.mrb[0].mxu0
  %v437 = vadd.f32 %v309, %v436
  %v438 = vpop.f32.mrb[0].mxu0
  %v439 = vadd.f32 %v311, %v438
  %v440 = vpop.f32.mrb[0].mxu0
  %v441 = vadd.f32 %v313, %v440
  %442 = vmatprep.mubr.bf16.mxu0 0
  %443 = vmatmul.mubr.bf16.gmra.mrb[0].mxu0 %v335
  %v444 = vpop.f32.mrb[0].mxu0
  %v445 = vadd.f32 %v317, %v444
  %v446 = vpop.f32.mrb[0].mxu0
  %v447 = vadd.f32 %v319, %v446
  %v448 = vpop.f32.mrb[0].mxu0
  %v449 = vpop.f32.mrb[0].mxu0
  %450 = vdwg.mxu0
  %451 = vrot.lane.b32.xlu0 %v29, 15
  %v452 = vpop.permute.xlu0 %451
  %453 = vrot.lane.b32.xlu0 %v21, 15
  %v454 = vpop.permute.xlu0 %453
  %455 = vrot.lane.b32.xlu0 %v22, 15
  %v456 = vpop.permute.xlu0 %455
  %457 = vrot.lane.b32.xlu0 %v28, 15
  %v458 = vpop.permute.xlu0 %457
  %vm459 = vcmask 121856
  %v460 = vsel %vm459, %v454, %v456
  %v461 = vsel %vm459, %v456, %v458
  %v462 = vsel %vm459, %v458, %v452
  %vm466 = vcmask 121856
  %v469 = vsel %vm466, %v452, %v454
  %vm471 = vmand %vm47, %vm59
  %vm472 = vmand %vm48, %vm60
  %vm473 = vmand %vm49, %vm61
  %vm474 = vmand %vm50, %vm62
  %v475 = vsel %vm471, 1, 0
  %v476 = vsel %vm472, 1, 0
  %v477 = vsel %vm473, 1, 0
  %v478 = vsel %vm474, 1, 0
  %vm479 = vcmp.eq.s32.totalorder %v475, 1
  %vm480 = vcmp.eq.s32.totalorder %v476, 1
  %vm481 = vcmp.eq.s32.totalorder %v477, 1
  %vm482 = vcmp.eq.s32.totalorder %v478, 1
  %vm483 = vmpackc.low %vm480, %vm479
  %vm484 = vmpackc.low %vm482, %vm481
  %v485 = vsel %vm483, 65537, 0
  %v486 = vsel %vm484, 65537, 0
  %v487 = vlaneseq
  %v488 = vshrl.u32 %v487, 7
  %v489 = vsub.s32 0, %v488
  %v490 = vrot.slane %v485, %v489
  %v491 = vlaneseq
  %v492 = vshrl.u32 %v491, 7
  %v493 = vsub.s32 4, %v492
  %v494 = vrot.slane %v485, %v493
  %v495 = vlaneseq
  %v496 = vshrl.u32 %v495, 7
  %v497 = vsub.s32 0, %v496
  %v498 = vrot.slane %v486, %v497
  %v499 = vlaneseq
  %v500 = vshrl.u32 %v499, 7
  %v501 = vsub.s32 4, %v500
  %v502 = vrot.slane %v486, %v501
  %vm503 = vcmp.ne.s16.totalorder %v490, 0
  %vm504 = vcmp.ne.s16.totalorder %v494, 0
  %vm505 = vcmp.ne.s16.totalorder %v498, 0
  %vm506 = vcmp.ne.s16.totalorder %v502, 0
  %v507 = vsel %vm503, %v469, 0
  %v508 = vsel %vm504, %v460, 0
  %v509 = vsel %vm505, %v461, 0
  %v510 = vsel %vm506, %v462, 0
  %s511 = scalar_lea.vmem %s1, 24
  %v512 = vld [vmem:[%s511] sm:$0xf]
  %v513 = vld [vmem:[%s511 + $0x4] sm:$0xf]
  %v514 = vld [vmem:[%s511 + $0x8] sm:$0x7]
  %v518 = vunpack.c.l.b16 %v512
  %v519 = vunpack.c.l.b16 %v513
  %v520 = vunpack.c.l.b16 %v514
  %v521 = vpack.c.b16 %v519, %v518
  %v522 = vpack.c.b16 %v520, %v520
  %v524 = vsel %vm198, %v521, 0
  %v527 = vsel %vm198, %v522, 0
  %v530 = vand.u32 %v507, %v208
  %v533 = vand.u32 %v508, %v208
  %v536 = vand.u32 %v509, %v208
  %v539 = vand.u32 %v510, %v208
  %541 = vmatprep.subr.bf16.mxu0 %v533
  %542 = vmatpush1.bf16.msra.mxu0 %v530
  %543 = vmatprep.subr.bf16.mxu0 0
  %544 = vmatpush1.bf16.msra.mxu0 0
  %545 = vmatprep.subr.bf16.mxu0 0
  %546 = vmatpush1.bf16.msra.mxu0 0
  %547 = vmatprep.subr.bf16.mxu0 0
  %548 = vmatpush1.bf16.msra.mxu0 0
  %549 = vmatprep.subr.bf16.mxu0 0
  %550 = vmatpush1.bf16.msra.mxu0 0
  %551 = vmatprep.subr.bf16.mxu0 0
  %552 = vmatpush1.bf16.msra.mxu0 0
  %553 = vmatprep.subr.bf16.mxu0 0
  %554 = vmatpush1.bf16.msra.mxu0 0
  %555 = vmatprep.subr.bf16.mxu0 0
  %556 = vmatpush1.bf16.msra.mxu0 0
  %557 = vmatprep.subr.bf16.mxu0 0
  %558 = vmatpush1.bf16.msra.mxu0 0
  %559 = vmatprep.subr.bf16.mxu0 0
  %560 = vmatpush1.bf16.msra.mxu0 0
  %561 = vmatprep.subr.bf16.mxu0 0
  %562 = vmatpush1.bf16.msra.mxu0 0
  %563 = vmatprep.subr.bf16.mxu0 0
  %564 = vmatpush1.bf16.msra.mxu0 0
  %565 = vmatprep.subr.bf16.mxu0 0
  %566 = vmatpush1.bf16.msra.mxu0 0
  %567 = vmatprep.subr.bf16.mxu0 0
  %568 = vmatpush1.bf16.msra.mxu0 0
  %569 = vmatprep.subr.bf16.mxu0 0
  %570 = vmatpush1.bf16.msra.mxu0 0
  %571 = vmatprep.subr.bf16.mxu0 0
  %572 = vmatpush1.bf16.msra.mxu0 0
  %573 = vmatprep.mubr.bf16.mxu0 0
  %574 = vmatmul.mubr.bf16.gmra.mrb[0].mxu0 %v524
  %v575 = vpop.f32.mrb[0].mxu0
  %v576 = vadd.f32 0.0, %v575
  %v577 = vpop.f32.mrb[0].mxu0
  %v578 = vadd.f32 0.0, %v577
  %v579 = vpop.f32.mrb[0].mxu0
  %v580 = vadd.f32 0.0, %v579
  %v581 = vpop.f32.mrb[0].mxu0
  %v582 = vadd.f32 0.0, %v581
  %583 = vmatprep.mubr.bf16.mxu0 0
  %584 = vmatmul.mubr.bf16.gmra.mrb[0].mxu0 %v527
  %v585 = vpop.f32.mrb[0].mxu0
  %v586 = vadd.f32 0.0, %v585
  %v587 = vpop.f32.mrb[0].mxu0
  %v588 = vadd.f32 0.0, %v587
  %v589 = vpop.f32.mrb[0].mxu0
  %v590 = vpop.f32.mrb[0].mxu0
  %591 = vdwg.mxu0
  %592 = vmatprep.subr.bf16.mxu0 %v539
  %593 = vmatpush1.bf16.msra.mxu0 %v536
  %594 = vmatprep.subr.bf16.mxu0 0
  %595 = vmatpush1.bf16.msra.mxu0 0
  %596 = vmatprep.subr.bf16.mxu0 0
  %597 = vmatpush1.bf16.msra.mxu0 0
  %598 = vmatprep.subr.bf16.mxu0 0
  %599 = vmatpush1.bf16.msra.mxu0 0
  %600 = vmatprep.subr.bf16.mxu0 0
  %601 = vmatpush1.bf16.msra.mxu0 0
  %602 = vmatprep.subr.bf16.mxu0 0
  %603 = vmatpush1.bf16.msra.mxu0 0
  %604 = vmatprep.subr.bf16.mxu0 0
  %605 = vmatpush1.bf16.msra.mxu0 0
  %606 = vmatprep.subr.bf16.mxu0 0
  %607 = vmatpush1.bf16.msra.mxu0 0
  %608 = vmatprep.subr.bf16.mxu0 0
  %609 = vmatpush1.bf16.msra.mxu0 0
  %610 = vmatprep.subr.bf16.mxu0 0
  %611 = vmatpush1.bf16.msra.mxu0 0
  %612 = vmatprep.subr.bf16.mxu0 0
  %613 = vmatpush1.bf16.msra.mxu0 0
  %614 = vmatprep.subr.bf16.mxu0 0
  %615 = vmatpush1.bf16.msra.mxu0 0
  %616 = vmatprep.subr.bf16.mxu0 0
  %617 = vmatpush1.bf16.msra.mxu0 0
  %618 = vmatprep.subr.bf16.mxu0 0
  %619 = vmatpush1.bf16.msra.mxu0 0
  %620 = vmatprep.subr.bf16.mxu0 0
  %621 = vmatpush1.bf16.msra.mxu0 0
  %622 = vmatprep.subr.bf16.mxu0 0
  %623 = vmatpush1.bf16.msra.mxu0 0
  %624 = vmatprep.mubr.bf16.mxu0 0
  %625 = vmatmul.mubr.bf16.gmra.mrb[0].mxu0 %v524
  %v626 = vpop.f32.mrb[0].mxu0
  %v627 = vadd.f32 0.0, %v626
  %v628 = vpop.f32.mrb[0].mxu0
  %v629 = vadd.f32 0.0, %v628
  %v630 = vpop.f32.mrb[0].mxu0
  %v631 = vadd.f32 0.0, %v630
  %v632 = vpop.f32.mrb[0].mxu0
  %v633 = vadd.f32 0.0, %v632
  %634 = vmatprep.mubr.bf16.mxu0 0
  %635 = vmatmul.mubr.bf16.gmra.mrb[0].mxu0 %v527
  %v636 = vpop.f32.mrb[0].mxu0
  %v637 = vadd.f32 0.0, %v636
  %v638 = vpop.f32.mrb[0].mxu0
  %v639 = vadd.f32 0.0, %v638
  %v640 = vpop.f32.mrb[0].mxu0
  %v641 = vpop.f32.mrb[0].mxu0
  %642 = vdwg.mxu0
  %v643 = vadd.f32 %v384, %v576
  %v644 = vadd.f32 %v386, %v578
  %v645 = vadd.f32 %v435, %v627
  %v646 = vadd.f32 %v437, %v629
  %v647 = vadd.f32 %v388, %v580
  %v648 = vadd.f32 %v390, %v582
  %v649 = vadd.f32 %v439, %v631
  %v650 = vadd.f32 %v441, %v633
  %v651 = vadd.f32 %v394, %v586
  %v652 = vadd.f32 %v396, %v588
  %v653 = vadd.f32 %v445, %v637
  %v654 = vadd.f32 %v447, %v639
  %655 = vrot.lane.b32.xlu0 %v29, 1
  %v656 = vpop.permute.xlu0 %655
  %657 = vrot.lane.b32.xlu0 %v21, 1
  %v658 = vpop.permute.xlu0 %657
  %659 = vrot.lane.b32.xlu0 %v22, 1
  %v660 = vpop.permute.xlu0 %659
  %661 = vrot.lane.b32.xlu0 %v28, 1
  %v662 = vpop.permute.xlu0 %661
  %vm663 = vcmask 7168
  %v664 = vsel %vm663, %v658, %v660
  %v665 = vsel %vm663, %v660, %v662
  %v666 = vsel %vm663, %v662, %v656
  %vm670 = vcmask 7168
  %v673 = vsel %vm670, %v656, %v658
  %v675 = vsel %vm55, 1, 0
  %v676 = vsel %vm56, 1, 0
  %v677 = vsel %vm57, 1, 0
  %v678 = vsel %vm58, 1, 0
  %vm679 = vcmp.eq.s32.totalorder %v675, 1
  %vm680 = vcmp.eq.s32.totalorder %v676, 1
  %vm681 = vcmp.eq.s32.totalorder %v677, 1
  %vm682 = vcmp.eq.s32.totalorder %v678, 1
  %vm683 = vmpackc.low %vm680, %vm679
  %vm684 = vmpackc.low %vm682, %vm681
  %v685 = vsel %vm683, 65537, 0
  %v686 = vsel %vm684, 65537, 0
  %v687 = vlaneseq
  %v688 = vshrl.u32 %v687, 7
  %v689 = vsub.s32 0, %v688
  %v690 = vrot.slane %v685, %v689
  %v691 = vlaneseq
  %v692 = vshrl.u32 %v691, 7
  %v693 = vsub.s32 4, %v692
  %v694 = vrot.slane %v685, %v693
  %v695 = vlaneseq
  %v696 = vshrl.u32 %v695, 7
  %v697 = vsub.s32 0, %v696
  %v698 = vrot.slane %v686, %v697
  %v699 = vlaneseq
  %v700 = vshrl.u32 %v699, 7
  %v701 = vsub.s32 4, %v700
  %v702 = vrot.slane %v686, %v701
  %vm703 = vcmp.ne.s16.totalorder %v690, 0
  %vm704 = vcmp.ne.s16.totalorder %v694, 0
  %vm705 = vcmp.ne.s16.totalorder %v698, 0
  %vm706 = vcmp.ne.s16.totalorder %v702, 0
  %v707 = vsel %vm703, %v673, 0
  %v708 = vsel %vm704, %v664, 0
  %v709 = vsel %vm705, %v665, 0
  %v710 = vsel %vm706, %v666, 0
  %s711 = scalar_lea.vmem %s1, 36
  %v712 = vld [vmem:[%s711] sm:$0xf]
  %v713 = vld [vmem:[%s711 + $0x4] sm:$0xf]
  %v714 = vld [vmem:[%s711 + $0x8] sm:$0x7]
  %v718 = vunpack.c.l.b16 %v712
  %v719 = vunpack.c.l.b16 %v713
  %v720 = vunpack.c.l.b16 %v714
  %v721 = vpack.c.b16 %v719, %v718
  %v722 = vpack.c.b16 %v720, %v720
  %v724 = vsel %vm198, %v721, 0
  %v727 = vsel %vm198, %v722, 0
  %v730 = vand.u32 %v707, %v208
  %v733 = vand.u32 %v708, %v208
  %v736 = vand.u32 %v709, %v208
  %v739 = vand.u32 %v710, %v208
  %741 = vmatprep.subr.bf16.mxu0 %v733
  %742 = vmatpush1.bf16.msra.mxu0 %v730
  %743 = vmatprep.subr.bf16.mxu0 0
  %744 = vmatpush1.bf16.msra.mxu0 0
  %745 = vmatprep.subr.bf16.mxu0 0
  %746 = vmatpush1.bf16.msra.mxu0 0
  %747 = vmatprep.subr.bf16.mxu0 0
  %748 = vmatpush1.bf16.msra.mxu0 0
  %749 = vmatprep.subr.bf16.mxu0 0
  %750 = vmatpush1.bf16.msra.mxu0 0
  %751 = vmatprep.subr.bf16.mxu0 0
  %752 = vmatpush1.bf16.msra.mxu0 0
  %753 = vmatprep.subr.bf16.mxu0 0
  %754 = vmatpush1.bf16.msra.mxu0 0
  %755 = vmatprep.subr.bf16.mxu0 0
  %756 = vmatpush1.bf16.msra.mxu0 0
  %757 = vmatprep.subr.bf16.mxu0 0
  %758 = vmatpush1.bf16.msra.mxu0 0
  %759 = vmatprep.subr.bf16.mxu0 0
  %760 = vmatpush1.bf16.msra.mxu0 0
  %761 = vmatprep.subr.bf16.mxu0 0
  %762 = vmatpush1.bf16.msra.mxu0 0
  %763 = vmatprep.subr.bf16.mxu0 0
  %764 = vmatpush1.bf16.msra.mxu0 0
  %765 = vmatprep.subr.bf16.mxu0 0
  %766 = vmatpush1.bf16.msra.mxu0 0
  %767 = vmatprep.subr.bf16.mxu0 0
  %768 = vmatpush1.bf16.msra.mxu0 0
  %769 = vmatprep.subr.bf16.mxu0 0
  %770 = vmatpush1.bf16.msra.mxu0 0
  %771 = vmatprep.subr.bf16.mxu0 0
  %772 = vmatpush1.bf16.msra.mxu0 0
  %773 = vmatprep.mubr.bf16.mxu0 0
  %774 = vmatmul.mubr.bf16.gmra.mrb[0].mxu0 %v724
  %v775 = vpop.f32.mrb[0].mxu0
  %v776 = vadd.f32 0.0, %v775
  %v777 = vpop.f32.mrb[0].mxu0
  %v778 = vadd.f32 0.0, %v777
  %v779 = vpop.f32.mrb[0].mxu0
  %v780 = vadd.f32 0.0, %v779
  %v781 = vpop.f32.mrb[0].mxu0
  %v782 = vadd.f32 0.0, %v781
  %783 = vmatprep.mubr.bf16.mxu0 0
  %784 = vmatmul.mubr.bf16.gmra.mrb[0].mxu0 %v727
  %v785 = vpop.f32.mrb[0].mxu0
  %v786 = vadd.f32 0.0, %v785
  %v787 = vpop.f32.mrb[0].mxu0
  %v788 = vadd.f32 0.0, %v787
  %v789 = vpop.f32.mrb[0].mxu0
  %v790 = vpop.f32.mrb[0].mxu0
  %791 = vdwg.mxu0
  %792 = vmatprep.subr.bf16.mxu0 %v739
  %793 = vmatpush1.bf16.msra.mxu0 %v736
  %794 = vmatprep.subr.bf16.mxu0 0
  %795 = vmatpush1.bf16.msra.mxu0 0
  %796 = vmatprep.subr.bf16.mxu0 0
  %797 = vmatpush1.bf16.msra.mxu0 0
  %798 = vmatprep.subr.bf16.mxu0 0
  %799 = vmatpush1.bf16.msra.mxu0 0
  %800 = vmatprep.subr.bf16.mxu0 0
  %801 = vmatpush1.bf16.msra.mxu0 0
  %802 = vmatprep.subr.bf16.mxu0 0
  %803 = vmatpush1.bf16.msra.mxu0 0
  %804 = vmatprep.subr.bf16.mxu0 0
  %805 = vmatpush1.bf16.msra.mxu0 0
  %806 = vmatprep.subr.bf16.mxu0 0
  %807 = vmatpush1.bf16.msra.mxu0 0
  %808 = vmatprep.subr.bf16.mxu0 0
  %809 = vmatpush1.bf16.msra.mxu0 0
  %810 = vmatprep.subr.bf16.mxu0 0
  %811 = vmatpush1.bf16.msra.mxu0 0
  %812 = vmatprep.subr.bf16.mxu0 0
  %813 = vmatpush1.bf16.msra.mxu0 0
  %814 = vmatprep.subr.bf16.mxu0 0
  %815 = vmatpush1.bf16.msra.mxu0 0
  %816 = vmatprep.subr.bf16.mxu0 0
  %817 = vmatpush1.bf16.msra.mxu0 0
  %818 = vmatprep.subr.bf16.mxu0 0
  %819 = vmatpush1.bf16.msra.mxu0 0
  %820 = vmatprep.subr.bf16.mxu0 0
  %821 = vmatpush1.bf16.msra.mxu0 0
  %822 = vmatprep.subr.bf16.mxu0 0
  %823 = vmatpush1.bf16.msra.mxu0 0
  %824 = vmatprep.mubr.bf16.mxu0 0
  %825 = vmatmul.mubr.bf16.gmra.mrb[0].mxu0 %v724
  %v826 = vpop.f32.mrb[0].mxu0
  %v827 = vadd.f32 0.0, %v826
  %v828 = vpop.f32.mrb[0].mxu0
  %v829 = vadd.f32 0.0, %v828
  %v830 = vpop.f32.mrb[0].mxu0
  %v831 = vadd.f32 0.0, %v830
  %v832 = vpop.f32.mrb[0].mxu0
  %v833 = vadd.f32 0.0, %v832
  %834 = vmatprep.mubr.bf16.mxu0 0
  %835 = vmatmul.mubr.bf16.gmra.mrb[0].mxu0 %v727
  %v836 = vpop.f32.mrb[0].mxu0
  %v837 = vadd.f32 0.0, %v836
  %v838 = vpop.f32.mrb[0].mxu0
  %v839 = vadd.f32 0.0, %v838
  %v840 = vpop.f32.mrb[0].mxu0
  %v841 = vpop.f32.mrb[0].mxu0
  %842 = vdwg.mxu0
  %v843 = vadd.f32 %v643, %v776
  %v844 = vadd.f32 %v644, %v778
  %v845 = vadd.f32 %v645, %v827
  %v846 = vadd.f32 %v646, %v829
  %v847 = vadd.f32 %v647, %v780
  %v848 = vadd.f32 %v648, %v782
  %v849 = vadd.f32 %v649, %v831
  %v850 = vadd.f32 %v650, %v833
  %v851 = vadd.f32 %v651, %v786
  %v852 = vadd.f32 %v652, %v788
  %v853 = vadd.f32 %v653, %v837
  %v854 = vadd.f32 %v654, %v839
  %s855 = scalar_lea.vmem %s1, 48
  %v856 = vld [vmem:[%s855] sm:$0xf]
  %v857 = vld [vmem:[%s855 + $0x4] sm:$0xf]
  %v858 = vld [vmem:[%s855 + $0x8] sm:$0x7]
  %v862 = vunpack.c.l.b16 %v856
  %v863 = vunpack.c.l.b16 %v857
  %v864 = vunpack.c.l.b16 %v858
  %v865 = vpack.c.b16 %v863, %v862
  %v866 = vpack.c.b16 %v864, %v864
  %v868 = vsel %vm198, %v865, 0
  %v871 = vsel %vm198, %v866, 0
  %v874 = vand.u32 %v21, %v208
  %v877 = vand.u32 %v22, %v208
  %v880 = vand.u32 %v28, %v208
  %v883 = vand.u32 %v29, %v208
  %885 = vmatprep.subr.bf16.mxu0 %v877
  %886 = vmatpush1.bf16.msra.mxu0 %v874
  %887 = vmatprep.subr.bf16.mxu0 0
  %888 = vmatpush1.bf16.msra.mxu0 0
  %889 = vmatprep.subr.bf16.mxu0 0
  %890 = vmatpush1.bf16.msra.mxu0 0
  %891 = vmatprep.subr.bf16.mxu0 0
  %892 = vmatpush1.bf16.msra.mxu0 0
  %893 = vmatprep.subr.bf16.mxu0 0
  %894 = vmatpush1.bf16.msra.mxu0 0
  %895 = vmatprep.subr.bf16.mxu0 0
  %896 = vmatpush1.bf16.msra.mxu0 0
  %897 = vmatprep.subr.bf16.mxu0 0
  %898 = vmatpush1.bf16.msra.mxu0 0
  %899 = vmatprep.subr.bf16.mxu0 0
  %900 = vmatpush1.bf16.msra.mxu0 0
  %901 = vmatprep.subr.bf16.mxu0 0
  %902 = vmatpush1.bf16.msra.mxu0 0
  %903 = vmatprep.subr.bf16.mxu0 0
  %904 = vmatpush1.bf16.msra.mxu0 0
  %905 = vmatprep.subr.bf16.mxu0 0
  %906 = vmatpush1.bf16.msra.mxu0 0
  %907 = vmatprep.subr.bf16.mxu0 0
  %908 = vmatpush1.bf16.msra.mxu0 0
  %909 = vmatprep.subr.bf16.mxu0 0
  %910 = vmatpush1.bf16.msra.mxu0 0
  %911 = vmatprep.subr.bf16.mxu0 0
  %912 = vmatpush1.bf16.msra.mxu0 0
  %913 = vmatprep.subr.bf16.mxu0 0
  %914 = vmatpush1.bf16.msra.mxu0 0
  %915 = vmatprep.subr.bf16.mxu0 0
  %916 = vmatpush1.bf16.msra.mxu0 0
  %917 = vmatprep.mubr.bf16.mxu0 0
  %918 = vmatmul.mubr.bf16.gmra.mrb[0].mxu0 %v868
  %v919 = vpop.f32.mrb[0].mxu0
  %v920 = vadd.f32 0.0, %v919
  %v921 = vpop.f32.mrb[0].mxu0
  %v922 = vadd.f32 0.0, %v921
  %v923 = vpop.f32.mrb[0].mxu0
  %v924 = vadd.f32 0.0, %v923
  %v925 = vpop.f32.mrb[0].mxu0
  %v926 = vadd.f32 0.0, %v925
  %927 = vmatprep.mubr.bf16.mxu0 0
  %928 = vmatmul.mubr.bf16.gmra.mrb[0].mxu0 %v871
  %v929 = vpop.f32.mrb[0].mxu0
  %v930 = vadd.f32 0.0, %v929
  %v931 = vpop.f32.mrb[0].mxu0
  %v932 = vadd.f32 0.0, %v931
  %v933 = vpop.f32.mrb[0].mxu0
  %v934 = vpop.f32.mrb[0].mxu0
  %935 = vdwg.mxu0
  %936 = vmatprep.subr.bf16.mxu0 %v883
  %937 = vmatpush1.bf16.msra.mxu0 %v880
  %938 = vmatprep.subr.bf16.mxu0 0
  %939 = vmatpush1.bf16.msra.mxu0 0
  %940 = vmatprep.subr.bf16.mxu0 0
  %941 = vmatpush1.bf16.msra.mxu0 0
  %942 = vmatprep.subr.bf16.mxu0 0
  %943 = vmatpush1.bf16.msra.mxu0 0
  %944 = vmatprep.subr.bf16.mxu0 0
  %945 = vmatpush1.bf16.msra.mxu0 0
  %946 = vmatprep.subr.bf16.mxu0 0
  %947 = vmatpush1.bf16.msra.mxu0 0
  %948 = vmatprep.subr.bf16.mxu0 0
  %949 = vmatpush1.bf16.msra.mxu0 0
  %950 = vmatprep.subr.bf16.mxu0 0
  %951 = vmatpush1.bf16.msra.mxu0 0
  %952 = vmatprep.subr.bf16.mxu0 0
  %953 = vmatpush1.bf16.msra.mxu0 0
  %954 = vmatprep.subr.bf16.mxu0 0
  %955 = vmatpush1.bf16.msra.mxu0 0
  %956 = vmatprep.subr.bf16.mxu0 0
  %957 = vmatpush1.bf16.msra.mxu0 0
  %958 = vmatprep.subr.bf16.mxu0 0
  %959 = vmatpush1.bf16.msra.mxu0 0
  %960 = vmatprep.subr.bf16.mxu0 0
  %961 = vmatpush1.bf16.msra.mxu0 0
  %962 = vmatprep.subr.bf16.mxu0 0
  %963 = vmatpush1.bf16.msra.mxu0 0
  %964 = vmatprep.subr.bf16.mxu0 0
  %965 = vmatpush1.bf16.msra.mxu0 0
  %966 = vmatprep.subr.bf16.mxu0 0
  %967 = vmatpush1.bf16.msra.mxu0 0
  %968 = vmatprep.mubr.bf16.mxu0 0
  %969 = vmatmul.mubr.bf16.gmra.mrb[0].mxu0 %v868
  %v970 = vpop.f32.mrb[0].mxu0
  %v971 = vadd.f32 0.0, %v970
  %v972 = vpop.f32.mrb[0].mxu0
  %v973 = vadd.f32 0.0, %v972
  %v974 = vpop.f32.mrb[0].mxu0
  %v975 = vadd.f32 0.0, %v974
  %v976 = vpop.f32.mrb[0].mxu0
  %v977 = vadd.f32 0.0, %v976
  %978 = vmatprep.mubr.bf16.mxu0 0
  %979 = vmatmul.mubr.bf16.gmra.mrb[0].mxu0 %v871
  %v980 = vpop.f32.mrb[0].mxu0
  %v981 = vadd.f32 0.0, %v980
  %v982 = vpop.f32.mrb[0].mxu0
  %v983 = vadd.f32 0.0, %v982
  %v984 = vpop.f32.mrb[0].mxu0
  %v985 = vpop.f32.mrb[0].mxu0
  %986 = vdwg.mxu0
  %v987 = vadd.f32 %v843, %v920
  %v988 = vadd.f32 %v844, %v922
  %v989 = vadd.f32 %v845, %v971
  %v990 = vadd.f32 %v846, %v973
  %v991 = vadd.f32 %v847, %v924
  %v992 = vadd.f32 %v848, %v926
  %v993 = vadd.f32 %v849, %v975
  %v994 = vadd.f32 %v850, %v977
  %v995 = vadd.f32 %v851, %v930
  %v996 = vadd.f32 %v852, %v932
  %v997 = vadd.f32 %v853, %v981
  %v998 = vadd.f32 %v854, %v983
  %999 = vrot.lane.b32.xlu0 %v21, 127
  %v1000 = vpop.permute.xlu0 %999
  %1001 = vrot.lane.b32.xlu0 %v22, 127
  %v1002 = vpop.permute.xlu0 %1001
  %1003 = vrot.lane.b32.xlu0 %v28, 127
  %v1004 = vpop.permute.xlu0 %1003
  %1005 = vrot.lane.b32.xlu0 %v29, 127
  %v1006 = vpop.permute.xlu0 %1005
  %vm1007 = vcmask 1039360
  %v1008 = vsel %vm1007, %v1000, %v1002
  %v1009 = vsel %vm1007, %v1002, %v1004
  %v1010 = vsel %vm1007, %v1004, %v1006
  %vm1014 = vcmask 1039360
  %v1017 = vsel %vm1014, %v1006, %v1000
  %v1019 = vsel %vm59, 1, 0
  %v1020 = vsel %vm60, 1, 0
  %v1021 = vsel %vm61, 1, 0
  %v1022 = vsel %vm62, 1, 0
  %vm1023 = vcmp.eq.s32.totalorder %v1019, 1
  %vm1024 = vcmp.eq.s32.totalorder %v1020, 1
  %vm1025 = vcmp.eq.s32.totalorder %v1021, 1
  %vm1026 = vcmp.eq.s32.totalorder %v1022, 1
  %vm1027 = vmpackc.low %vm1024, %vm1023
  %vm1028 = vmpackc.low %vm1026, %vm1025
  %v1029 = vsel %vm1027, 65537, 0
  %v1030 = vsel %vm1028, 65537, 0
  %v1031 = vlaneseq
  %v1032 = vshrl.u32 %v1031, 7
  %v1033 = vsub.s32 0, %v1032
  %v1034 = vrot.slane %v1029, %v1033
  %v1035 = vlaneseq
  %v1036 = vshrl.u32 %v1035, 7
  %v1037 = vsub.s32 4, %v1036
  %v1038 = vrot.slane %v1029, %v1037
  %v1039 = vlaneseq
  %v1040 = vshrl.u32 %v1039, 7
  %v1041 = vsub.s32 0, %v1040
  %v1042 = vrot.slane %v1030, %v1041
  %v1043 = vlaneseq
  %v1044 = vshrl.u32 %v1043, 7
  %v1045 = vsub.s32 4, %v1044
  %v1046 = vrot.slane %v1030, %v1045
  %vm1047 = vcmp.ne.s16.totalorder %v1034, 0
  %vm1048 = vcmp.ne.s16.totalorder %v1038, 0
  %vm1049 = vcmp.ne.s16.totalorder %v1042, 0
  %vm1050 = vcmp.ne.s16.totalorder %v1046, 0
  %v1051 = vsel %vm1047, %v1008, 0
  %v1052 = vsel %vm1048, %v1009, 0
  %v1053 = vsel %vm1049, %v1010, 0
  %v1054 = vsel %vm1050, %v1017, 0
  %s1055 = scalar_lea.vmem %s1, 60
  %v1056 = vld [vmem:[%s1055] sm:$0xf]
  %v1057 = vld [vmem:[%s1055 + $0x4] sm:$0xf]
  %v1058 = vld [vmem:[%s1055 + $0x8] sm:$0x7]
  %v1062 = vunpack.c.l.b16 %v1056
  %v1063 = vunpack.c.l.b16 %v1057
  %v1064 = vunpack.c.l.b16 %v1058
  %v1065 = vpack.c.b16 %v1063, %v1062
  %v1066 = vpack.c.b16 %v1064, %v1064
  %v1068 = vsel %vm198, %v1065, 0
  %v1071 = vsel %vm198, %v1066, 0
  %v1074 = vand.u32 %v1051, %v208
  %v1077 = vand.u32 %v1052, %v208
  %v1080 = vand.u32 %v1053, %v208
  %v1083 = vand.u32 %v1054, %v208
  %1085 = vmatprep.subr.bf16.mxu0 %v1077
  %1086 = vmatpush1.bf16.msra.mxu0 %v1074
  %1087 = vmatprep.subr.bf16.mxu0 0
  %1088 = vmatpush1.bf16.msra.mxu0 0
  %1089 = vmatprep.subr.bf16.mxu0 0
  %1090 = vmatpush1.bf16.msra.mxu0 0
  %1091 = vmatprep.subr.bf16.mxu0 0
  %1092 = vmatpush1.bf16.msra.mxu0 0
  %1093 = vmatprep.subr.bf16.mxu0 0
  %1094 = vmatpush1.bf16.msra.mxu0 0
  %1095 = vmatprep.subr.bf16.mxu0 0
  %1096 = vmatpush1.bf16.msra.mxu0 0
  %1097 = vmatprep.subr.bf16.mxu0 0
  %1098 = vmatpush1.bf16.msra.mxu0 0
  %1099 = vmatprep.subr.bf16.mxu0 0
  %1100 = vmatpush1.bf16.msra.mxu0 0
  %1101 = vmatprep.subr.bf16.mxu0 0
  %1102 = vmatpush1.bf16.msra.mxu0 0
  %1103 = vmatprep.subr.bf16.mxu0 0
  %1104 = vmatpush1.bf16.msra.mxu0 0
  %1105 = vmatprep.subr.bf16.mxu0 0
  %1106 = vmatpush1.bf16.msra.mxu0 0
  %1107 = vmatprep.subr.bf16.mxu0 0
  %1108 = vmatpush1.bf16.msra.mxu0 0
  %1109 = vmatprep.subr.bf16.mxu0 0
  %1110 = vmatpush1.bf16.msra.mxu0 0
  %1111 = vmatprep.subr.bf16.mxu0 0
  %1112 = vmatpush1.bf16.msra.mxu0 0
  %1113 = vmatprep.subr.bf16.mxu0 0
  %1114 = vmatpush1.bf16.msra.mxu0 0
  %1115 = vmatprep.subr.bf16.mxu0 0
  %1116 = vmatpush1.bf16.msra.mxu0 0
  %1117 = vmatprep.mubr.bf16.mxu0 0
  %1118 = vmatmul.mubr.bf16.gmra.mrb[0].mxu0 %v1068
  %v1119 = vpop.f32.mrb[0].mxu0
  %v1120 = vadd.f32 0.0, %v1119
  %v1121 = vpop.f32.mrb[0].mxu0
  %v1122 = vadd.f32 0.0, %v1121
  %v1123 = vpop.f32.mrb[0].mxu0
  %v1124 = vadd.f32 0.0, %v1123
  %v1125 = vpop.f32.mrb[0].mxu0
  %v1126 = vadd.f32 0.0, %v1125
  %1127 = vmatprep.mubr.bf16.mxu0 0
  %1128 = vmatmul.mubr.bf16.gmra.mrb[0].mxu0 %v1071
  %v1129 = vpop.f32.mrb[0].mxu0
  %v1130 = vadd.f32 0.0, %v1129
  %v1131 = vpop.f32.mrb[0].mxu0
  %v1132 = vadd.f32 0.0, %v1131
  %v1133 = vpop.f32.mrb[0].mxu0
  %v1134 = vpop.f32.mrb[0].mxu0
  %1135 = vdwg.mxu0
  %1136 = vmatprep.subr.bf16.mxu0 %v1083
  %1137 = vmatpush1.bf16.msra.mxu0 %v1080
  %1138 = vmatprep.subr.bf16.mxu0 0
  %1139 = vmatpush1.bf16.msra.mxu0 0
  %1140 = vmatprep.subr.bf16.mxu0 0
  %1141 = vmatpush1.bf16.msra.mxu0 0
  %1142 = vmatprep.subr.bf16.mxu0 0
  %1143 = vmatpush1.bf16.msra.mxu0 0
  %1144 = vmatprep.subr.bf16.mxu0 0
  %1145 = vmatpush1.bf16.msra.mxu0 0
  %1146 = vmatprep.subr.bf16.mxu0 0
  %1147 = vmatpush1.bf16.msra.mxu0 0
  %1148 = vmatprep.subr.bf16.mxu0 0
  %1149 = vmatpush1.bf16.msra.mxu0 0
  %1150 = vmatprep.subr.bf16.mxu0 0
  %1151 = vmatpush1.bf16.msra.mxu0 0
  %1152 = vmatprep.subr.bf16.mxu0 0
  %1153 = vmatpush1.bf16.msra.mxu0 0
  %1154 = vmatprep.subr.bf16.mxu0 0
  %1155 = vmatpush1.bf16.msra.mxu0 0
  %1156 = vmatprep.subr.bf16.mxu0 0
  %1157 = vmatpush1.bf16.msra.mxu0 0
  %1158 = vmatprep.subr.bf16.mxu0 0
  %1159 = vmatpush1.bf16.msra.mxu0 0
  %1160 = vmatprep.subr.bf16.mxu0 0
  %1161 = vmatpush1.bf16.msra.mxu0 0
  %1162 = vmatprep.subr.bf16.mxu0 0
  %1163 = vmatpush1.bf16.msra.mxu0 0
  %1164 = vmatprep.subr.bf16.mxu0 0
  %1165 = vmatpush1.bf16.msra.mxu0 0
  %1166 = vmatprep.subr.bf16.mxu0 0
  %1167 = vmatpush1.bf16.msra.mxu0 0
  %1168 = vmatprep.mubr.bf16.mxu0 0
  %1169 = vmatmul.mubr.bf16.gmra.mrb[0].mxu0 %v1068
  %v1170 = vpop.f32.mrb[0].mxu0
  %v1171 = vadd.f32 0.0, %v1170
  %v1172 = vpop.f32.mrb[0].mxu0
  %v1173 = vadd.f32 0.0, %v1172
  %v1174 = vpop.f32.mrb[0].mxu0
  %v1175 = vadd.f32 0.0, %v1174
  %v1176 = vpop.f32.mrb[0].mxu0
  %v1177 = vadd.f32 0.0, %v1176
  %1178 = vmatprep.mubr.bf16.mxu0 0
  %1179 = vmatmul.mubr.bf16.gmra.mrb[0].mxu0 %v1071
  %v1180 = vpop.f32.mrb[0].mxu0
  %v1181 = vadd.f32 0.0, %v1180
  %v1182 = vpop.f32.mrb[0].mxu0
  %v1183 = vadd.f32 0.0, %v1182
  %v1184 = vpop.f32.mrb[0].mxu0
  %v1185 = vpop.f32.mrb[0].mxu0
  %1186 = vdwg.mxu0
  %v1187 = vadd.f32 %v987, %v1120
  %v1188 = vadd.f32 %v988, %v1122
  %v1189 = vadd.f32 %v989, %v1171
  %v1190 = vadd.f32 %v990, %v1173
  %v1191 = vadd.f32 %v991, %v1124
  %v1192 = vadd.f32 %v992, %v1126
  %v1193 = vadd.f32 %v993, %v1175
  %v1194 = vadd.f32 %v994, %v1177
  %v1195 = vadd.f32 %v995, %v1130
  %v1196 = vadd.f32 %v996, %v1132
  %v1197 = vadd.f32 %v997, %v1181
  %v1198 = vadd.f32 %v998, %v1183
  %1199 = vrot.lane.b32.xlu0 %v21, 113
  %v1200 = vpop.permute.xlu0 %1199
  %1201 = vrot.lane.b32.xlu0 %v22, 113
  %v1202 = vpop.permute.xlu0 %1201
  %1203 = vrot.lane.b32.xlu0 %v28, 113
  %v1204 = vpop.permute.xlu0 %1203
  %1205 = vrot.lane.b32.xlu0 %v29, 113
  %v1206 = vpop.permute.xlu0 %1205
  %vm1207 = vcmask 924672
  %v1208 = vsel %vm1207, %v1200, %v1202
  %v1209 = vsel %vm1207, %v1202, %v1204
  %v1210 = vsel %vm1207, %v1204, %v1206
  %vm1214 = vcmask 924672
  %v1217 = vsel %vm1214, %v1206, %v1200
  %vm1219 = vmand %vm51, %vm55
  %vm1220 = vmand %vm52, %vm56
  %vm1221 = vmand %vm53, %vm57
  %vm1222 = vmand %vm54, %vm58
  %v1223 = vsel %vm1219, 1, 0
  %v1224 = vsel %vm1220, 1, 0
  %v1225 = vsel %vm1221, 1, 0
  %v1226 = vsel %vm1222, 1, 0
  %vm1227 = vcmp.eq.s32.totalorder %v1223, 1
  %vm1228 = vcmp.eq.s32.totalorder %v1224, 1
  %vm1229 = vcmp.eq.s32.totalorder %v1225, 1
  %vm1230 = vcmp.eq.s32.totalorder %v1226, 1
  %vm1231 = vmpackc.low %vm1228, %vm1227
  %vm1232 = vmpackc.low %vm1230, %vm1229
  %v1233 = vsel %vm1231, 65537, 0
  %v1234 = vsel %vm1232, 65537, 0
  %v1235 = vlaneseq
  %v1236 = vshrl.u32 %v1235, 7
  %v1237 = vsub.s32 0, %v1236
  %v1238 = vrot.slane %v1233, %v1237
  %v1239 = vlaneseq
  %v1240 = vshrl.u32 %v1239, 7
  %v1241 = vsub.s32 4, %v1240
  %v1242 = vrot.slane %v1233, %v1241
  %v1243 = vlaneseq
  %v1244 = vshrl.u32 %v1243, 7
  %v1245 = vsub.s32 0, %v1244
  %v1246 = vrot.slane %v1234, %v1245
  %v1247 = vlaneseq
  %v1248 = vshrl.u32 %v1247, 7
  %v1249 = vsub.s32 4, %v1248
  %v1250 = vrot.slane %v1234, %v1249
  %vm1251 = vcmp.ne.s16.totalorder %v1238, 0
  %vm1252 = vcmp.ne.s16.totalorder %v1242, 0
  %vm1253 = vcmp.ne.s16.totalorder %v1246, 0
  %vm1254 = vcmp.ne.s16.totalorder %v1250, 0
  %v1255 = vsel %vm1251, %v1208, 0
  %v1256 = vsel %vm1252, %v1209, 0
  %v1257 = vsel %vm1253, %v1210, 0
  %v1258 = vsel %vm1254, %v1217, 0
  %s1259 = scalar_lea.vmem %s1, 72
  %v1260 = vld [vmem:[%s1259] sm:$0xf]
  %v1261 = vld [vmem:[%s1259 + $0x4] sm:$0xf]
  %v1262 = vld [vmem:[%s1259 + $0x8] sm:$0x7]
  %v1266 = vunpack.c.l.b16 %v1260
  %v1267 = vunpack.c.l.b16 %v1261
  %v1268 = vunpack.c.l.b16 %v1262
  %v1269 = vpack.c.b16 %v1267, %v1266
  %v1270 = vpack.c.b16 %v1268, %v1268
  %v1272 = vsel %vm198, %v1269, 0
  %v1275 = vsel %vm198, %v1270, 0
  %v1278 = vand.u32 %v1255, %v208
  %v1281 = vand.u32 %v1256, %v208
  %v1284 = vand.u32 %v1257, %v208
  %v1287 = vand.u32 %v1258, %v208
  %1289 = vmatprep.subr.bf16.mxu0 %v1281
  %1290 = vmatpush1.bf16.msra.mxu0 %v1278
  %1291 = vmatprep.subr.bf16.mxu0 0
  %1292 = vmatpush1.bf16.msra.mxu0 0
  %1293 = vmatprep.subr.bf16.mxu0 0
  %1294 = vmatpush1.bf16.msra.mxu0 0
  %1295 = vmatprep.subr.bf16.mxu0 0
  %1296 = vmatpush1.bf16.msra.mxu0 0
  %1297 = vmatprep.subr.bf16.mxu0 0
  %1298 = vmatpush1.bf16.msra.mxu0 0
  %1299 = vmatprep.subr.bf16.mxu0 0
  %1300 = vmatpush1.bf16.msra.mxu0 0
  %1301 = vmatprep.subr.bf16.mxu0 0
  %1302 = vmatpush1.bf16.msra.mxu0 0
  %1303 = vmatprep.subr.bf16.mxu0 0
  %1304 = vmatpush1.bf16.msra.mxu0 0
  %1305 = vmatprep.subr.bf16.mxu0 0
  %1306 = vmatpush1.bf16.msra.mxu0 0
  %1307 = vmatprep.subr.bf16.mxu0 0
  %1308 = vmatpush1.bf16.msra.mxu0 0
  %1309 = vmatprep.subr.bf16.mxu0 0
  %1310 = vmatpush1.bf16.msra.mxu0 0
  %1311 = vmatprep.subr.bf16.mxu0 0
  %1312 = vmatpush1.bf16.msra.mxu0 0
  %1313 = vmatprep.subr.bf16.mxu0 0
  %1314 = vmatpush1.bf16.msra.mxu0 0
  %1315 = vmatprep.subr.bf16.mxu0 0
  %1316 = vmatpush1.bf16.msra.mxu0 0
  %1317 = vmatprep.subr.bf16.mxu0 0
  %1318 = vmatpush1.bf16.msra.mxu0 0
  %1319 = vmatprep.subr.bf16.mxu0 0
  %1320 = vmatpush1.bf16.msra.mxu0 0
  %1321 = vmatprep.mubr.bf16.mxu0 0
  %1322 = vmatmul.mubr.bf16.gmra.mrb[0].mxu0 %v1272
  %v1323 = vpop.f32.mrb[0].mxu0
  %v1324 = vadd.f32 0.0, %v1323
  %v1325 = vpop.f32.mrb[0].mxu0
  %v1326 = vadd.f32 0.0, %v1325
  %v1327 = vpop.f32.mrb[0].mxu0
  %v1328 = vadd.f32 0.0, %v1327
  %v1329 = vpop.f32.mrb[0].mxu0
  %v1330 = vadd.f32 0.0, %v1329
  %1331 = vmatprep.mubr.bf16.mxu0 0
  %1332 = vmatmul.mubr.bf16.gmra.mrb[0].mxu0 %v1275
  %v1333 = vpop.f32.mrb[0].mxu0
  %v1334 = vadd.f32 0.0, %v1333
  %v1335 = vpop.f32.mrb[0].mxu0
  %v1336 = vadd.f32 0.0, %v1335
  %v1337 = vpop.f32.mrb[0].mxu0
  %v1338 = vpop.f32.mrb[0].mxu0
  %1339 = vdwg.mxu0
  %1340 = vmatprep.subr.bf16.mxu0 %v1287
  %1341 = vmatpush1.bf16.msra.mxu0 %v1284
  %1342 = vmatprep.subr.bf16.mxu0 0
  %1343 = vmatpush1.bf16.msra.mxu0 0
  %1344 = vmatprep.subr.bf16.mxu0 0
  %1345 = vmatpush1.bf16.msra.mxu0 0
  %1346 = vmatprep.subr.bf16.mxu0 0
  %1347 = vmatpush1.bf16.msra.mxu0 0
  %1348 = vmatprep.subr.bf16.mxu0 0
  %1349 = vmatpush1.bf16.msra.mxu0 0
  %1350 = vmatprep.subr.bf16.mxu0 0
  %1351 = vmatpush1.bf16.msra.mxu0 0
  %1352 = vmatprep.subr.bf16.mxu0 0
  %1353 = vmatpush1.bf16.msra.mxu0 0
  %1354 = vmatprep.subr.bf16.mxu0 0
  %1355 = vmatpush1.bf16.msra.mxu0 0
  %1356 = vmatprep.subr.bf16.mxu0 0
  %1357 = vmatpush1.bf16.msra.mxu0 0
  %1358 = vmatprep.subr.bf16.mxu0 0
  %1359 = vmatpush1.bf16.msra.mxu0 0
  %1360 = vmatprep.subr.bf16.mxu0 0
  %1361 = vmatpush1.bf16.msra.mxu0 0
  %1362 = vmatprep.subr.bf16.mxu0 0
  %1363 = vmatpush1.bf16.msra.mxu0 0
  %1364 = vmatprep.subr.bf16.mxu0 0
  %1365 = vmatpush1.bf16.msra.mxu0 0
  %1366 = vmatprep.subr.bf16.mxu0 0
  %1367 = vmatpush1.bf16.msra.mxu0 0
  %1368 = vmatprep.subr.bf16.mxu0 0
  %1369 = vmatpush1.bf16.msra.mxu0 0
  %1370 = vmatprep.subr.bf16.mxu0 0
  %1371 = vmatpush1.bf16.msra.mxu0 0
  %1372 = vmatprep.mubr.bf16.mxu0 0
  %1373 = vmatmul.mubr.bf16.gmra.mrb[0].mxu0 %v1272
  %v1374 = vpop.f32.mrb[0].mxu0
  %v1375 = vadd.f32 0.0, %v1374
  %v1376 = vpop.f32.mrb[0].mxu0
  %v1377 = vadd.f32 0.0, %v1376
  %v1378 = vpop.f32.mrb[0].mxu0
  %v1379 = vadd.f32 0.0, %v1378
  %v1380 = vpop.f32.mrb[0].mxu0
  %v1381 = vadd.f32 0.0, %v1380
  %1382 = vmatprep.mubr.bf16.mxu0 0
  %1383 = vmatmul.mubr.bf16.gmra.mrb[0].mxu0 %v1275
  %v1384 = vpop.f32.mrb[0].mxu0
  %v1385 = vadd.f32 0.0, %v1384
  %v1386 = vpop.f32.mrb[0].mxu0
  %v1387 = vadd.f32 0.0, %v1386
  %v1388 = vpop.f32.mrb[0].mxu0
  %v1389 = vpop.f32.mrb[0].mxu0
  %1390 = vdwg.mxu0
  %v1391 = vadd.f32 %v1187, %v1324
  %v1392 = vadd.f32 %v1188, %v1326
  %v1393 = vadd.f32 %v1189, %v1375
  %v1394 = vadd.f32 %v1190, %v1377
  %v1395 = vadd.f32 %v1191, %v1328
  %v1396 = vadd.f32 %v1192, %v1330
  %v1397 = vadd.f32 %v1193, %v1379
  %v1398 = vadd.f32 %v1194, %v1381
  %v1399 = vadd.f32 %v1195, %v1334
  %v1400 = vadd.f32 %v1196, %v1336
  %v1401 = vadd.f32 %v1197, %v1385
  %v1402 = vadd.f32 %v1198, %v1387
  %1403 = vrot.lane.b32.xlu0 %v21, 112
  %v1404 = vpop.permute.xlu0 %1403
  %1405 = vrot.lane.b32.xlu0 %v22, 112
  %v1406 = vpop.permute.xlu0 %1405
  %1407 = vrot.lane.b32.xlu0 %v28, 112
  %v1408 = vpop.permute.xlu0 %1407
  %1409 = vrot.lane.b32.xlu0 %v29, 112
  %v1410 = vpop.permute.xlu0 %1409
  %vm1411 = vcmask 916480
  %v1412 = vsel %vm1411, %v1404, %v1406
  %v1413 = vsel %vm1411, %v1406, %v1408
  %v1414 = vsel %vm1411, %v1408, %v1410
  %vm1418 = vcmask 916480
  %v1421 = vsel %vm1418, %v1410, %v1404
  %v1423 = vsel %vm51, 1, 0
  %v1424 = vsel %vm52, 1, 0
  %v1425 = vsel %vm53, 1, 0
  %v1426 = vsel %vm54, 1, 0
  %vm1427 = vcmp.eq.s32.totalorder %v1423, 1
  %vm1428 = vcmp.eq.s32.totalorder %v1424, 1
  %vm1429 = vcmp.eq.s32.totalorder %v1425, 1
  %vm1430 = vcmp.eq.s32.totalorder %v1426, 1
  %vm1431 = vmpackc.low %vm1428, %vm1427
  %vm1432 = vmpackc.low %vm1430, %vm1429
  %v1433 = vsel %vm1431, 65537, 0
  %v1434 = vsel %vm1432, 65537, 0
  %v1435 = vlaneseq
  %v1436 = vshrl.u32 %v1435, 7
  %v1437 = vsub.s32 0, %v1436
  %v1438 = vrot.slane %v1433, %v1437
  %v1439 = vlaneseq
  %v1440 = vshrl.u32 %v1439, 7
  %v1441 = vsub.s32 4, %v1440
  %v1442 = vrot.slane %v1433, %v1441
  %v1443 = vlaneseq
  %v1444 = vshrl.u32 %v1443, 7
  %v1445 = vsub.s32 0, %v1444
  %v1446 = vrot.slane %v1434, %v1445
  %v1447 = vlaneseq
  %v1448 = vshrl.u32 %v1447, 7
  %v1449 = vsub.s32 4, %v1448
  %v1450 = vrot.slane %v1434, %v1449
  %vm1451 = vcmp.ne.s16.totalorder %v1438, 0
  %vm1452 = vcmp.ne.s16.totalorder %v1442, 0
  %vm1453 = vcmp.ne.s16.totalorder %v1446, 0
  %vm1454 = vcmp.ne.s16.totalorder %v1450, 0
  %v1455 = vsel %vm1451, %v1412, 0
  %v1456 = vsel %vm1452, %v1413, 0
  %v1457 = vsel %vm1453, %v1414, 0
  %v1458 = vsel %vm1454, %v1421, 0
  %s1459 = scalar_lea.vmem %s1, 84
  %v1460 = vld [vmem:[%s1459] sm:$0xf]
  %v1461 = vld [vmem:[%s1459 + $0x4] sm:$0xf]
  %v1462 = vld [vmem:[%s1459 + $0x8] sm:$0x7]
  %v1466 = vunpack.c.l.b16 %v1460
  %v1467 = vunpack.c.l.b16 %v1461
  %v1468 = vunpack.c.l.b16 %v1462
  %v1469 = vpack.c.b16 %v1467, %v1466
  %v1470 = vpack.c.b16 %v1468, %v1468
  %v1472 = vsel %vm198, %v1469, 0
  %v1475 = vsel %vm198, %v1470, 0
  %v1478 = vand.u32 %v1455, %v208
  %v1481 = vand.u32 %v1456, %v208
  %v1484 = vand.u32 %v1457, %v208
  %v1487 = vand.u32 %v1458, %v208
  %1489 = vmatprep.subr.bf16.mxu0 %v1481
  %1490 = vmatpush1.bf16.msra.mxu0 %v1478
  %1491 = vmatprep.subr.bf16.mxu0 0
  %1492 = vmatpush1.bf16.msra.mxu0 0
  %1493 = vmatprep.subr.bf16.mxu0 0
  %1494 = vmatpush1.bf16.msra.mxu0 0
  %1495 = vmatprep.subr.bf16.mxu0 0
  %1496 = vmatpush1.bf16.msra.mxu0 0
  %1497 = vmatprep.subr.bf16.mxu0 0
  %1498 = vmatpush1.bf16.msra.mxu0 0
  %1499 = vmatprep.subr.bf16.mxu0 0
  %1500 = vmatpush1.bf16.msra.mxu0 0
  %1501 = vmatprep.subr.bf16.mxu0 0
  %1502 = vmatpush1.bf16.msra.mxu0 0
  %1503 = vmatprep.subr.bf16.mxu0 0
  %1504 = vmatpush1.bf16.msra.mxu0 0
  %1505 = vmatprep.subr.bf16.mxu0 0
  %1506 = vmatpush1.bf16.msra.mxu0 0
  %1507 = vmatprep.subr.bf16.mxu0 0
  %1508 = vmatpush1.bf16.msra.mxu0 0
  %1509 = vmatprep.subr.bf16.mxu0 0
  %1510 = vmatpush1.bf16.msra.mxu0 0
  %1511 = vmatprep.subr.bf16.mxu0 0
  %1512 = vmatpush1.bf16.msra.mxu0 0
  %1513 = vmatprep.subr.bf16.mxu0 0
  %1514 = vmatpush1.bf16.msra.mxu0 0
  %1515 = vmatprep.subr.bf16.mxu0 0
  %1516 = vmatpush1.bf16.msra.mxu0 0
  %1517 = vmatprep.subr.bf16.mxu0 0
  %1518 = vmatpush1.bf16.msra.mxu0 0
  %1519 = vmatprep.subr.bf16.mxu0 0
  %1520 = vmatpush1.bf16.msra.mxu0 0
  %1521 = vmatprep.mubr.bf16.mxu0 0
  %1522 = vmatmul.mubr.bf16.gmra.mrb[0].mxu0 %v1472
  %v1523 = vpop.f32.mrb[0].mxu0
  %v1524 = vadd.f32 0.0, %v1523
  %v1525 = vpop.f32.mrb[0].mxu0
  %v1526 = vadd.f32 0.0, %v1525
  %v1527 = vpop.f32.mrb[0].mxu0
  %v1528 = vadd.f32 0.0, %v1527
  %v1529 = vpop.f32.mrb[0].mxu0
  %v1530 = vadd.f32 0.0, %v1529
  %1531 = vmatprep.mubr.bf16.mxu0 0
  %1532 = vmatmul.mubr.bf16.gmra.mrb[0].mxu0 %v1475
  %v1533 = vpop.f32.mrb[0].mxu0
  %v1534 = vadd.f32 0.0, %v1533
  %v1535 = vpop.f32.mrb[0].mxu0
  %v1536 = vadd.f32 0.0, %v1535
  %v1537 = vpop.f32.mrb[0].mxu0
  %v1538 = vpop.f32.mrb[0].mxu0
  %1539 = vdwg.mxu0
  %1540 = vmatprep.subr.bf16.mxu0 %v1487
  %1541 = vmatpush1.bf16.msra.mxu0 %v1484
  %1542 = vmatprep.subr.bf16.mxu0 0
  %1543 = vmatpush1.bf16.msra.mxu0 0
  %1544 = vmatprep.subr.bf16.mxu0 0
  %1545 = vmatpush1.bf16.msra.mxu0 0
  %1546 = vmatprep.subr.bf16.mxu0 0
  %1547 = vmatpush1.bf16.msra.mxu0 0
  %1548 = vmatprep.subr.bf16.mxu0 0
  %1549 = vmatpush1.bf16.msra.mxu0 0
  %1550 = vmatprep.subr.bf16.mxu0 0
  %1551 = vmatpush1.bf16.msra.mxu0 0
  %1552 = vmatprep.subr.bf16.mxu0 0
  %1553 = vmatpush1.bf16.msra.mxu0 0
  %1554 = vmatprep.subr.bf16.mxu0 0
  %1555 = vmatpush1.bf16.msra.mxu0 0
  %1556 = vmatprep.subr.bf16.mxu0 0
  %1557 = vmatpush1.bf16.msra.mxu0 0
  %1558 = vmatprep.subr.bf16.mxu0 0
  %1559 = vmatpush1.bf16.msra.mxu0 0
  %1560 = vmatprep.subr.bf16.mxu0 0
  %1561 = vmatpush1.bf16.msra.mxu0 0
  %1562 = vmatprep.subr.bf16.mxu0 0
  %1563 = vmatpush1.bf16.msra.mxu0 0
  %1564 = vmatprep.subr.bf16.mxu0 0
  %1565 = vmatpush1.bf16.msra.mxu0 0
  %1566 = vmatprep.subr.bf16.mxu0 0
  %1567 = vmatpush1.bf16.msra.mxu0 0
  %1568 = vmatprep.subr.bf16.mxu0 0
  %1569 = vmatpush1.bf16.msra.mxu0 0
  %1570 = vmatprep.subr.bf16.mxu0 0
  %1571 = vmatpush1.bf16.msra.mxu0 0
  %1572 = vmatprep.mubr.bf16.mxu0 0
  %1573 = vmatmul.mubr.bf16.gmra.mrb[0].mxu0 %v1472
  %v1574 = vpop.f32.mrb[0].mxu0
  %v1575 = vadd.f32 0.0, %v1574
  %v1576 = vpop.f32.mrb[0].mxu0
  %v1577 = vadd.f32 0.0, %v1576
  %v1578 = vpop.f32.mrb[0].mxu0
  %v1579 = vadd.f32 0.0, %v1578
  %v1580 = vpop.f32.mrb[0].mxu0
  %v1581 = vadd.f32 0.0, %v1580
  %1582 = vmatprep.mubr.bf16.mxu0 0
  %1583 = vmatmul.mubr.bf16.gmra.mrb[0].mxu0 %v1475
  %v1584 = vpop.f32.mrb[0].mxu0
  %v1585 = vadd.f32 0.0, %v1584
  %v1586 = vpop.f32.mrb[0].mxu0
  %v1587 = vadd.f32 0.0, %v1586
  %v1588 = vpop.f32.mrb[0].mxu0
  %v1589 = vpop.f32.mrb[0].mxu0
  %1590 = vdwg.mxu0
  %v1591 = vadd.f32 %v1391, %v1524
  %v1592 = vadd.f32 %v1392, %v1526
  %v1593 = vadd.f32 %v1393, %v1575
  %v1594 = vadd.f32 %v1394, %v1577
  %v1595 = vadd.f32 %v1395, %v1528
  %v1596 = vadd.f32 %v1396, %v1530
  %v1597 = vadd.f32 %v1397, %v1579
  %v1598 = vadd.f32 %v1398, %v1581
  %v1599 = vadd.f32 %v1399, %v1534
  %v1600 = vadd.f32 %v1400, %v1536
  %v1601 = vadd.f32 %v1401, %v1585
  %v1602 = vadd.f32 %v1402, %v1587
  %1603 = vrot.lane.b32.xlu0 %v21, 111
  %v1604 = vpop.permute.xlu0 %1603
  %1605 = vrot.lane.b32.xlu0 %v22, 111
  %v1606 = vpop.permute.xlu0 %1605
  %1607 = vrot.lane.b32.xlu0 %v28, 111
  %v1608 = vpop.permute.xlu0 %1607
  %1609 = vrot.lane.b32.xlu0 %v29, 111
  %v1610 = vpop.permute.xlu0 %1609
  %vm1611 = vcmask 908288
  %v1612 = vsel %vm1611, %v1604, %v1606
  %v1613 = vsel %vm1611, %v1606, %v1608
  %v1614 = vsel %vm1611, %v1608, %v1610
  %vm1618 = vcmask 908288
  %v1621 = vsel %vm1618, %v1610, %v1604
  %vm1623 = vmand %vm51, %vm59
  %vm1624 = vmand %vm52, %vm60
  %vm1625 = vmand %vm53, %vm61
  %vm1626 = vmand %vm54, %vm62
  %v1627 = vsel %vm1623, 1, 0
  %v1628 = vsel %vm1624, 1, 0
  %v1629 = vsel %vm1625, 1, 0
  %v1630 = vsel %vm1626, 1, 0
  %vm1631 = vcmp.eq.s32.totalorder %v1627, 1
  %vm1632 = vcmp.eq.s32.totalorder %v1628, 1
  %vm1633 = vcmp.eq.s32.totalorder %v1629, 1
  %vm1634 = vcmp.eq.s32.totalorder %v1630, 1
  %vm1635 = vmpackc.low %vm1632, %vm1631
  %vm1636 = vmpackc.low %vm1634, %vm1633
  %v1637 = vsel %vm1635, 65537, 0
  %v1638 = vsel %vm1636, 65537, 0
  %v1639 = vlaneseq
  %v1640 = vshrl.u32 %v1639, 7
  %v1641 = vsub.s32 0, %v1640
  %v1642 = vrot.slane %v1637, %v1641
  %v1643 = vlaneseq
  %v1644 = vshrl.u32 %v1643, 7
  %v1645 = vsub.s32 4, %v1644
  %v1646 = vrot.slane %v1637, %v1645
  %v1647 = vlaneseq
  %v1648 = vshrl.u32 %v1647, 7
  %v1649 = vsub.s32 0, %v1648
  %v1650 = vrot.slane %v1638, %v1649
  %v1651 = vlaneseq
  %v1652 = vshrl.u32 %v1651, 7
  %v1653 = vsub.s32 4, %v1652
  %v1654 = vrot.slane %v1638, %v1653
  %vm1655 = vcmp.ne.s16.totalorder %v1642, 0
  %vm1656 = vcmp.ne.s16.totalorder %v1646, 0
  %vm1657 = vcmp.ne.s16.totalorder %v1650, 0
  %vm1658 = vcmp.ne.s16.totalorder %v1654, 0
  %v1659 = vsel %vm1655, %v1612, 0
  %v1660 = vsel %vm1656, %v1613, 0
  %v1661 = vsel %vm1657, %v1614, 0
  %v1662 = vsel %vm1658, %v1621, 0
  %s1663 = scalar_lea.vmem %s1, 96
  %v1664 = vld [vmem:[%s1663] sm:$0xf]
  %v1665 = vld [vmem:[%s1663 + $0x4] sm:$0xf]
  %v1666 = vld [vmem:[%s1663 + $0x8] sm:$0x7]
  %v1670 = vunpack.c.l.b16 %v1664
  %v1671 = vunpack.c.l.b16 %v1665
  %v1672 = vunpack.c.l.b16 %v1666
  %v1673 = vpack.c.b16 %v1671, %v1670
  %v1674 = vpack.c.b16 %v1672, %v1672
  %v1676 = vsel %vm198, %v1673, 0
  %v1679 = vsel %vm198, %v1674, 0
  %v1682 = vand.u32 %v1659, %v208
  %v1685 = vand.u32 %v1660, %v208
  %v1688 = vand.u32 %v1661, %v208
  %v1691 = vand.u32 %v1662, %v208
  %1693 = vmatprep.subr.bf16.mxu0 %v1685
  %1694 = vmatpush1.bf16.msra.mxu0 %v1682
  %1695 = vmatprep.subr.bf16.mxu0 0
  %1696 = vmatpush1.bf16.msra.mxu0 0
  %1697 = vmatprep.subr.bf16.mxu0 0
  %1698 = vmatpush1.bf16.msra.mxu0 0
  %1699 = vmatprep.subr.bf16.mxu0 0
  %1700 = vmatpush1.bf16.msra.mxu0 0
  %1701 = vmatprep.subr.bf16.mxu0 0
  %1702 = vmatpush1.bf16.msra.mxu0 0
  %1703 = vmatprep.subr.bf16.mxu0 0
  %1704 = vmatpush1.bf16.msra.mxu0 0
  %1705 = vmatprep.subr.bf16.mxu0 0
  %1706 = vmatpush1.bf16.msra.mxu0 0
  %1707 = vmatprep.subr.bf16.mxu0 0
  %1708 = vmatpush1.bf16.msra.mxu0 0
  %1709 = vmatprep.subr.bf16.mxu0 0
  %1710 = vmatpush1.bf16.msra.mxu0 0
  %1711 = vmatprep.subr.bf16.mxu0 0
  %1712 = vmatpush1.bf16.msra.mxu0 0
  %1713 = vmatprep.subr.bf16.mxu0 0
  %1714 = vmatpush1.bf16.msra.mxu0 0
  %1715 = vmatprep.subr.bf16.mxu0 0
  %1716 = vmatpush1.bf16.msra.mxu0 0
  %1717 = vmatprep.subr.bf16.mxu0 0
  %1718 = vmatpush1.bf16.msra.mxu0 0
  %1719 = vmatprep.subr.bf16.mxu0 0
  %1720 = vmatpush1.bf16.msra.mxu0 0
  %1721 = vmatprep.subr.bf16.mxu0 0
  %1722 = vmatpush1.bf16.msra.mxu0 0
  %1723 = vmatprep.subr.bf16.mxu0 0
  %1724 = vmatpush1.bf16.msra.mxu0 0
  %1725 = vmatprep.mubr.bf16.mxu0 0
  %1726 = vmatmul.mubr.bf16.gmra.mrb[0].mxu0 %v1676
  %v1727 = vpop.f32.mrb[0].mxu0
  %v1728 = vadd.f32 0.0, %v1727
  %v1729 = vpop.f32.mrb[0].mxu0
  %v1730 = vadd.f32 0.0, %v1729
  %v1731 = vpop.f32.mrb[0].mxu0
  %v1732 = vadd.f32 0.0, %v1731
  %v1733 = vpop.f32.mrb[0].mxu0
  %v1734 = vadd.f32 0.0, %v1733
  %1735 = vmatprep.mubr.bf16.mxu0 0
  %1736 = vmatmul.mubr.bf16.gmra.mrb[0].mxu0 %v1679
  %v1737 = vpop.f32.mrb[0].mxu0
  %v1738 = vadd.f32 0.0, %v1737
  %v1739 = vpop.f32.mrb[0].mxu0
  %v1740 = vadd.f32 0.0, %v1739
  %v1741 = vpop.f32.mrb[0].mxu0
  %v1742 = vpop.f32.mrb[0].mxu0
  %1743 = vdwg.mxu0
  %1744 = vmatprep.subr.bf16.mxu0 %v1691
  %1745 = vmatpush1.bf16.msra.mxu0 %v1688
  %1746 = vmatprep.subr.bf16.mxu0 0
  %1747 = vmatpush1.bf16.msra.mxu0 0
  %1748 = vmatprep.subr.bf16.mxu0 0
  %1749 = vmatpush1.bf16.msra.mxu0 0
  %1750 = vmatprep.subr.bf16.mxu0 0
  %1751 = vmatpush1.bf16.msra.mxu0 0
  %1752 = vmatprep.subr.bf16.mxu0 0
  %1753 = vmatpush1.bf16.msra.mxu0 0
  %1754 = vmatprep.subr.bf16.mxu0 0
  %1755 = vmatpush1.bf16.msra.mxu0 0
  %1756 = vmatprep.subr.bf16.mxu0 0
  %1757 = vmatpush1.bf16.msra.mxu0 0
  %1758 = vmatprep.subr.bf16.mxu0 0
  %1759 = vmatpush1.bf16.msra.mxu0 0
  %1760 = vmatprep.subr.bf16.mxu0 0
  %1761 = vmatpush1.bf16.msra.mxu0 0
  %1762 = vmatprep.subr.bf16.mxu0 0
  %1763 = vmatpush1.bf16.msra.mxu0 0
  %1764 = vmatprep.subr.bf16.mxu0 0
  %1765 = vmatpush1.bf16.msra.mxu0 0
  %1766 = vmatprep.subr.bf16.mxu0 0
  %1767 = vmatpush1.bf16.msra.mxu0 0
  %1768 = vmatprep.subr.bf16.mxu0 0
  %1769 = vmatpush1.bf16.msra.mxu0 0
  %1770 = vmatprep.subr.bf16.mxu0 0
  %1771 = vmatpush1.bf16.msra.mxu0 0
  %1772 = vmatprep.subr.bf16.mxu0 0
  %1773 = vmatpush1.bf16.msra.mxu0 0
  %1774 = vmatprep.subr.bf16.mxu0 0
  %1775 = vmatpush1.bf16.msra.mxu0 0
  %1776 = vmatprep.mubr.bf16.mxu0 0
  %1777 = vmatmul.mubr.bf16.gmra.mrb[0].mxu0 %v1676
  %v1778 = vpop.f32.mrb[0].mxu0
  %v1779 = vadd.f32 0.0, %v1778
  %v1780 = vpop.f32.mrb[0].mxu0
  %v1781 = vadd.f32 0.0, %v1780
  %v1782 = vpop.f32.mrb[0].mxu0
  %v1783 = vadd.f32 0.0, %v1782
  %v1784 = vpop.f32.mrb[0].mxu0
  %v1785 = vadd.f32 0.0, %v1784
  %1786 = vmatprep.mubr.bf16.mxu0 0
  %1787 = vmatmul.mubr.bf16.gmra.mrb[0].mxu0 %v1679
  %v1788 = vpop.f32.mrb[0].mxu0
  %v1789 = vadd.f32 0.0, %v1788
  %v1790 = vpop.f32.mrb[0].mxu0
  %v1791 = vadd.f32 0.0, %v1790
  %v1792 = vpop.f32.mrb[0].mxu0
  %v1793 = vpop.f32.mrb[0].mxu0
  %1794 = vdwg.mxu0
  %v1795 = vadd.f32 %v1591, %v1728
  %v1796 = vadd.f32 %v1592, %v1730
  %v1797 = vadd.f32 %v1593, %v1779
  %v1798 = vadd.f32 %v1594, %v1781
  %v1799 = vadd.f32 %v1595, %v1732
  %v1800 = vadd.f32 %v1596, %v1734
  %v1801 = vadd.f32 %v1597, %v1783
  %v1802 = vadd.f32 %v1598, %v1785
  %v1803 = vadd.f32 %v1599, %v1738
  %v1804 = vadd.f32 %v1600, %v1740
  %v1805 = vadd.f32 %v1601, %v1789
  %v1806 = vadd.f32 %v1602, %v1791
  %v1807 = vld [vmem:[%s2] sm:$0xff]
  %v1808 = vld [vmem:[%s2 + $0x8] sm:$0xff]
  %v1809 = vld [vmem:[%s2 + $0x10] sm:$0x1f]
  %1811 = vset.pattern.permute.xlu0 0
  %1812 = vperm.xlu0 %1811, %v1807
  %v1813 = vpop.permute.xlu0 %1812
  %1816 = vset.pattern.permute.xlu0 0
  %1817 = vperm.xlu0 %1816, %v1808
  %v1818 = vpop.permute.xlu0 %1817
  %1821 = vset.pattern.permute.xlu0 0
  %1822 = vperm.xlu0 %1821, %v1809
  %v1823 = vpop.permute.xlu0 %1822
  %v1825 = vadd.f32 %v1795, %v1813
  %v1826 = vadd.f32 %v1796, %v1813
  %v1827 = vadd.f32 %v1797, %v1813
  %v1828 = vadd.f32 %v1798, %v1813
  %v1829 = vadd.f32 %v1799, %v1818
  %v1830 = vadd.f32 %v1800, %v1818
  %v1831 = vadd.f32 %v1801, %v1818
  %v1832 = vadd.f32 %v1802, %v1818
  %v1833 = vadd.f32 %v1803, %v1823
  %v1834 = vadd.f32 %v1804, %v1823
  %v1835 = vadd.f32 %v1805, %v1823
  %v1836 = vadd.f32 %v1806, %v1823
  %1837 = vst [vmem:[%s3] sm:$0xff] %v1825
  %1838 = vst [vmem:[%s3 + $0x8] sm:$0xff] %v1826
  %1839 = vst [vmem:[%s3 + $0x10] sm:$0xff] %v1829
  %1840 = vst [vmem:[%s3 + $0x18] sm:$0xff] %v1830
  %1841 = vst [vmem:[%s3 + $0x20] sm:$0x1f] %v1833
  %1842 = vst [vmem:[%s3 + $0x28] sm:$0x1f] %v1834
  %s1843 = scalar_lea.vmem %s3, 48
  %1844 = vst [vmem:[%s1843] sm:$0xff] %v1827
  %1845 = vst [vmem:[%s1843 + $0x8] sm:$0xff] %v1828
  %1846 = vst [vmem:[%s1843 + $0x10] sm:$0xff] %v1831
  %1847 = vst [vmem:[%s1843 + $0x18] sm:$0xff] %v1832
  %1848 = vst [vmem:[%s1843 + $0x20] sm:$0x1f] %v1835
  %1849 = vst [vmem:[%s1843 + $0x28] sm:$0x1f] %v1836
  // Predicated region
  $region14: #{dummy_deeplabv3_forward.1} parent=0 // pred_check
    _
  $region15: #{dummy_deeplabv3_forward.1} parent=0 // pred_check_branch
    %1851 = sbr.rel (0) target = $region17
  $region16: #{dummy_deeplabv3_forward.1} parent=0 // pred_region
    _
  $region17: #{dummy_deeplabv3_forward.1} parent=0 // pred_fallthru
    _
  // Predicated region
  $region18: #{dummy_deeplabv3_forward.1} parent=0 // pred_check
    _
  $region19: #{dummy_deeplabv3_forward.1} parent=0 // pred_check_branch
    %1853 = sbr.rel (0) target = $region21
  $region20: #{dummy_deeplabv3_forward.1} parent=0 // pred_region
    _
  $region21: #{dummy_deeplabv3_forward.1} parent=0 // pred_fallthru
    _

</llo_original>
